<compile_context>
chip_gen: v6e
topology: v6e:2x2x1
jax: 0.10.0
libtpu: 0.0.40
codegen_flags: <defaults>
</compile_context>

<pallas_src>
from functools import partial
import math

import jax
import jax.numpy as jnp
from jax.experimental import pallas as pl
from jax.experimental.pallas import tpu as pltpu

_INV_SQRT2 = 0.7071067811865476


def _layernorm(x, g, b, eps=1e-5):
    x = x.astype(jnp.float32)
    mu = jnp.mean(x, axis=-1, keepdims=True)
    var = jnp.mean((x - mu) ** 2, axis=-1, keepdims=True)
    return (x - mu) * jax.lax.rsqrt(var + eps) * g + b


# --------------------- kernel 1: LN1 + fused Q/K/V projection ---------------------
def ln_qkv_kernel(x_ref, g1_ref, b1_ref,
                  wq_ref, bq_ref, wk_ref, bk_ref, wv_ref, bv_ref,
                  q_ref, k_ref, v_ref, *, num_heads, scale):
    x2 = _layernorm(x_ref[0], g1_ref[...], b1_ref[...])                    # (TS, E) f32
    q = (jnp.dot(x2, wq_ref[...], preferred_element_type=jnp.float32) + bq_ref[...]) * scale
    k = jnp.dot(x2, wk_ref[...], preferred_element_type=jnp.float32) + bk_ref[...]
    v = jnp.dot(x2, wv_ref[...], preferred_element_type=jnp.float32) + bv_ref[...]
    dh = x2.shape[-1] // num_heads
    # Head split here is pure layout plumbing (static lane slices, lane-aligned when
    # dh % 128 == 0); attention math in kernel 2 is fully head-batched.
    for h in range(num_heads):
        sl = slice(h * dh, (h + 1) * dh)
        q_ref[0, h] = q[:, sl].astype(q_ref.dtype)
        k_ref[0, h] = k[:, sl].astype(k_ref.dtype)
        v_ref[0, h] = v[:, sl].astype(v_ref.dtype)


# ---- kernel 2: flash attention + out-proj + residual + LN2 + FF(GELU) + residual ----
def attn_ffn_kernel(x_ref, q_ref, k_ref, v_ref,
                    wo_ref, bo_ref, g2_ref, beta2_ref,
                    w1_ref, fb1_ref, w2_ref, fb2_ref,
                    o_ref, m_scr, l_scr, acc_scr, *, num_heads):
    kv = pl.program_id(2)

    @pl.when(kv == 0)
    def _init():
        m_scr[...] = jnp.full_like(m_scr, -jnp.inf)
        l_scr[...] = jnp.zeros_like(l_scr)
        acc_scr[...] = jnp.zeros_like(acc_scr)

    qh = q_ref[0]        # (H, TQ, dh) -- q already scaled by 1/sqrt(dh) in kernel 1
    kh = k_ref[0]        # (H, TK, dh)
    vh = v_ref[0]        # (H, TK, dh)

    # All heads at once: batched MXU matmuls, no per-head loop, no lane slicing.
    s = jnp.einsum('hqd,hkd->hqk', qh, kh, preferred_element_type=jnp.float32)
    # TODO(synk): optional attention mask (module is exercised with mask=None); a mask
    # would be added to `s` here before the online-softmax update.

    m_prev = m_scr[...]
    m_new = jnp.maximum(m_prev, jnp.max(s, axis=-1, keepdims=True))        # (H, TQ, 1)
    alpha = jnp.exp(m_prev - m_new)
    p = jnp.exp(s - m_new)                                                 # (H, TQ, TK)
    l_scr[...] = alpha * l_scr[...] + jnp.sum(p, axis=-1, keepdims=True)
    acc_scr[...] = alpha * acc_scr[...] + jnp.einsum(
        'hqk,hkd->hqd', p, vh, preferred_element_type=jnp.float32)
    m_scr[...] = m_new

    @pl.when(kv == pl.num_programs(2) - 1)
    def _finalize():
        H = num_heads
        dh = q_ref.shape[-1]
        E = x_ref.shape[-1]
        tq = q_ref.shape[2]
        # Normalize once per q tile; EUP reciprocal + one Newton step (~f32 exact).
        inv_l = pl.reciprocal(l_scr[...], approx=True)
        inv_l = inv_l * (2.0 - l_scr[...] * inv_l)
        attn = acc_scr[...] * inv_l                                        # (H, TQ, dh)
        # Out-projection without concatenating heads: each head's output is consumed
        # directly against the matching dh-row block of W_O (full-width contractions).
        proj = jnp.zeros((tq, E), dtype=jnp.float32)
        for h in range(H):
            proj = proj + jnp.dot(attn[h], wo_ref[h * dh:(h + 1) * dh, :],
                                  preferred_element_type=jnp.float32)
        y = x_ref[0].astype(jnp.float32) + proj + bo_ref[...]              # residual 1
        x2 = _layernorm(y, g2_ref[...], beta2_ref[...])
        h1 = jnp.dot(x2, w1_ref[...], preferred_element_type=jnp.float32) + fb1_ref[...]
        h1 = 0.5 * h1 * (1.0 + jax.lax.erf(h1 * _INV_SQRT2))               # exact GELU
        ff = jnp.dot(h1, w2_ref[...], preferred_element_type=jnp.float32) + fb2_ref[...]
        o_ref[0] = (y + ff).astype(o_ref.dtype)                            # residual 2


# ----------------------------------- wrapper -----------------------------------
def encoder_layer(x, params, num_heads, *, seq_tile=128):
    B, S, E = x.shape
    assert E % num_heads == 0, "embedding_dim must be divisible by num_heads"
    dh = E // num_heads
    F = params["w1"].shape[1]
    t = seq_tile if (S % seq_tile == 0) else S          # sequence tile (fallback: whole seq)
    scale = 1.0 / math.sqrt(dh)
    H = num_heads

    def _bytes(*shapes):
        return sum(int(math.prod(s)) * 4 for s in shapes)

    def _vmem_limit(block_bytes, scratch_bytes=0):
        # explicit budget: double-buffered blocks + scratch + headroom, clamped to 64 MiB
        # so the same setting also fits v7x's smaller VMEM.
        need = 2 * block_bytes + scratch_bytes + (4 << 20)
        return int(min(max(need, 16 << 20), 64 << 20))

    # ---------------- kernel 1: LN1 + QKV projections ----------------
    qkv_struct = jax.ShapeDtypeStruct((B, H, S, dh), jnp.float32)
    vmem1 = _vmem_limit(_bytes((t, E), (1, E), (1, E),
                               (E, E), (1, E), (E, E), (1, E), (E, E), (1, E),
                               (H, t, dh), (H, t, dh), (H, t, dh)))
    q, k, v = pl.pallas_call(
        partial(ln_qkv_kernel, num_heads=H, scale=scale),
        out_shape=(qkv_struct, qkv_struct, qkv_struct),
        grid=(B, S // t),
        in_specs=[
            pl.BlockSpec((1, t, E), lambda b, s: (b, s, 0)),
            pl.BlockSpec((1, E), lambda b, s: (0, 0)),       # ln1 gamma
            pl.BlockSpec((1, E), lambda b, s: (0, 0)),       # ln1 beta
            pl.BlockSpec((E, E), lambda b, s: (0, 0)),       # wq
            pl.BlockSpec((1, E), lambda b, s: (0, 0)),       # bq
            pl.BlockSpec((E, E), lambda b, s: (0, 0)),       # wk
            pl.BlockSpec((1, E), lambda b, s: (0, 0)),       # bk
            pl.BlockSpec((E, E), lambda b, s: (0, 0)),       # wv
            pl.BlockSpec((1, E), lambda b, s: (0, 0)),       # bv
        ],
        out_specs=(
            pl.BlockSpec((1, H, t, dh), lambda b, s: (b, 0, s, 0)),
            pl.BlockSpec((1, H, t, dh), lambda b, s: (b, 0, s, 0)),
            pl.BlockSpec((1, H, t, dh), lambda b, s: (b, 0, s, 0)),
        ),
        compiler_params=pltpu.CompilerParams(
            dimension_semantics=("parallel", "parallel"),
            vmem_limit_bytes=vmem1),
    )(x, params["ln1_g"], params["ln1_b"],
      params["wq"], params["bq"], params["wk"], params["bk"], params["wv"], params["bv"])

    # ---------------- kernel 2: flash attention + out-proj + LN2 + FFN ----------------
    vmem2 = _vmem_limit(
        _bytes((t, E), (H, t, dh), (H, t, dh), (H, t, dh),
               (E, E), (1, E), (1, E), (1, E), (E, F), (1, F), (F, E), (1, E), (t, E)),
        scratch_bytes=_bytes((H, t, 1), (H, t, 1), (H, t, dh)))
    out = pl.pallas_call(
        partial(attn_ffn_kernel, num_heads=H),
        out_shape=jax.ShapeDtypeStruct((B, S, E), x.dtype),
        grid=(B, S // t, S // t),
        in_specs=[
            pl.BlockSpec((1, t, E), lambda b, qi, ki: (b, qi, 0)),            # residual x
            pl.BlockSpec((1, H, t, dh), lambda b, qi, ki: (b, 0, qi, 0)),     # q
            pl.BlockSpec((1, H, t, dh), lambda b, qi, ki: (b, 0, ki, 0)),     # k
            pl.BlockSpec((1, H, t, dh), lambda b, qi, ki: (b, 0, ki, 0)),     # v
            pl.BlockSpec((E, E), lambda b, qi, ki: (0, 0)),                   # wo
            pl.BlockSpec((1, E), lambda b, qi, ki: (0, 0)),                   # bo
            pl.BlockSpec((1, E), lambda b, qi, ki: (0, 0)),                   # ln2 gamma
            pl.BlockSpec((1, E), lambda b, qi, ki: (0, 0)),                   # ln2 beta
            pl.BlockSpec((E, F), lambda b, qi, ki: (0, 0)),                   # w1
            pl.BlockSpec((1, F), lambda b, qi, ki: (0, 0)),                   # b1
            pl.BlockSpec((F, E), lambda b, qi, ki: (0, 0)),                   # w2
            pl.BlockSpec((1, E), lambda b, qi, ki: (0, 0)),                   # b2
        ],
        out_specs=pl.BlockSpec((1, t, E), lambda b, qi, ki: (b, qi, 0)),
        scratch_shapes=[
            pltpu.VMEM((H, t, 1), jnp.float32),     # running max  m
            pltpu.VMEM((H, t, 1), jnp.float32),     # running sum  l
            pltpu.VMEM((H, t, dh), jnp.float32),    # output accumulator
        ],
        compiler_params=pltpu.CompilerParams(
            dimension_semantics=("parallel", "parallel", "arbitrary"),
            vmem_limit_bytes=vmem2),
    )(x, q, k, v, params["wo"], params["bo"], params["ln2_g"], params["ln2_b"],
      params["w1"], params["b1"], params["w2"], params["b2"])
    return out


# ---------------- pure-JAX reference (for correctness check) ----------------
def _ref_forward(x, p, num_heads):
    def ln(v, g, b):
        mu = v.mean(-1, keepdims=True)
        var = ((v - mu) ** 2).mean(-1, keepdims=True)
        return (v - mu) / jnp.sqrt(var + 1e-5) * g + b

    B, S, E = x.shape
    dh = E // num_heads
    x2 = ln(x, p["ln1_g"], p["ln1_b"])
    q = x2 @ p["wq"] + p["bq"]
    k = x2 @ p["wk"] + p["bk"]
    v = x2 @ p["wv"] + p["bv"]
    q = q.reshape(B, S, num_heads, dh).transpose(0, 2, 1, 3)
    k = k.reshape(B, S, num_heads, dh).transpose(0, 2, 1, 3)
    v = v.reshape(B, S, num_heads, dh).transpose(0, 2, 1, 3)
    scores = jnp.einsum("bhqd,bhkd->bhqk", q / jnp.sqrt(dh), k)
    attn = jax.nn.softmax(scores, axis=-1)
    o = jnp.einsum("bhqk,bhkd->bhqd", attn, v)
    o = o.transpose(0, 2, 1, 3).reshape(B, S, E)
    o = o @ p["wo"] + p["bo"]
    x = x + o
    x2 = ln(x, p["ln2_g"], p["ln2_b"])
    h1 = x2 @ p["w1"] + p["b1"]
    h1 = 0.5 * h1 * (1.0 + jax.lax.erf(h1 / jnp.sqrt(2.0)))
    h2 = h1 @ p["w2"] + p["b2"]
    return x + h2


if __name__ == "__main__":
    # Small, but lane-dense / MXU-friendly: E, F, dh and tiles are multiples of 128,
    # and S = 2 tiles so the flash accumulation across kv tiles is exercised.
    B, S, E, H, F = 2, 256, 256, 2, 512

    key = jax.random.PRNGKey(0)
    keys = jax.random.split(key, 9)
    x = jax.random.normal(keys[0], (B, S, E), dtype=jnp.float32)

    def init_linear(k, din, dout):
        kw, kb = jax.random.split(k)
        w = jax.random.normal(kw, (din, dout), jnp.float32) * 0.05   # (in, out) == W_torch.T
        b = jax.random.normal(kb, (1, dout), jnp.float32) * 0.05
        return w, b

    wq, bq = init_linear(keys[1], E, E)
    wk, bk = init_linear(keys[2], E, E)
    wv, bv = init_linear(keys[3], E, E)
    wo, bo = init_linear(keys[4], E, E)
    w1, b1 = init_linear(keys[5], E, F)
    w2, b2 = init_linear(keys[6], F, E)

    params = dict(
        ln1_g=1.0 + 0.1 * jax.random.normal(keys[7], (1, E), jnp.float32),
        ln1_b=0.1 * jax.random.normal(keys[8], (1, E), jnp.float32),
        wq=wq, bq=bq, wk=wk, bk=bk, wv=wv, bv=bv, wo=wo, bo=bo,
        ln2_g=jnp.ones((1, E), jnp.float32), ln2_b=jnp.zeros((1, E), jnp.float32),
        w1=w1, b1=b1, w2=w2, b2=b2,
    )

    out = jax.block_until_ready(encoder_layer(x, params, num_heads=H))

    ref = _ref_forward(x, params, H)
    assert out.shape == (B, S, E)
    max_err = float(jnp.max(jnp.abs(out - ref)))
    assert jnp.allclose(out, ref, atol=2e-3, rtol=2e-3), f"mismatch vs reference (max|err|={max_err})"

    print("KERNEL_OK")
</pallas_src>

<mosaic_0001>
module attributes {stable_mosaic.version = 11 : i64} {
  func.func @ln_qkv_kernel(%arg0: i32, %arg1: i32, %arg2: memref<1x128x256xf32, #tpu.memory_space<vmem>>, %arg3: memref<1x256xf32, #tpu.memory_space<vmem>>, %arg4: memref<1x256xf32, #tpu.memory_space<vmem>>, %arg5: memref<256x256xf32, #tpu.memory_space<vmem>>, %arg6: memref<1x256xf32, #tpu.memory_space<vmem>>, %arg7: memref<256x256xf32, #tpu.memory_space<vmem>>, %arg8: memref<1x256xf32, #tpu.memory_space<vmem>>, %arg9: memref<256x256xf32, #tpu.memory_space<vmem>>, %arg10: memref<1x256xf32, #tpu.memory_space<vmem>>, %arg11: memref<1x2x128x128xf32, #tpu.memory_space<vmem>>, %arg12: memref<1x2x128x128xf32, #tpu.memory_space<vmem>>, %arg13: memref<1x2x128x128xf32, #tpu.memory_space<vmem>>) attributes {dimension_semantics = [#tpu.dimension_semantics<parallel>, #tpu.dimension_semantics<parallel>], iteration_bounds = array<i64: 2, 2>, scalar_prefetch = 0 : i64, scratch_operands = 0 : i64, tpu.core_type = #tpu.core_type<tc>, window_params = [{transform_indices = @transform_0, window_bounds = array<i64: 1, 128, 256>}, {pipeline_mode = #tpu.pipeline_mode<synchronous>, transform_indices = @transform_1, window_bounds = array<i64: 1, 256>}, {pipeline_mode = #tpu.pipeline_mode<synchronous>, transform_indices = @transform_2, window_bounds = array<i64: 1, 256>}, {pipeline_mode = #tpu.pipeline_mode<synchronous>, transform_indices = @transform_3, window_bounds = array<i64: 256, 256>}, {pipeline_mode = #tpu.pipeline_mode<synchronous>, transform_indices = @transform_4, window_bounds = array<i64: 1, 256>}, {pipeline_mode = #tpu.pipeline_mode<synchronous>, transform_indices = @transform_5, window_bounds = array<i64: 256, 256>}, {pipeline_mode = #tpu.pipeline_mode<synchronous>, transform_indices = @transform_6, window_bounds = array<i64: 1, 256>}, {pipeline_mode = #tpu.pipeline_mode<synchronous>, transform_indices = @transform_7, window_bounds = array<i64: 256, 256>}, {pipeline_mode = #tpu.pipeline_mode<synchronous>, transform_indices = @transform_8, window_bounds = array<i64: 1, 256>}, {transform_indices = @transform_9, window_bounds = array<i64: 1, 2, 128, 128>}, {transform_indices = @transform_10, window_bounds = array<i64: 1, 2, 128, 128>}, {transform_indices = @transform_11, window_bounds = array<i64: 1, 2, 128, 128>}]} {
    %c0 = arith.constant 0 : index
    %c0_0 = arith.constant 0 : index
    %c0_1 = arith.constant 0 : index
    %0 = vector.load %arg2[%c0, %c0_0, %c0_1] : memref<1x128x256xf32, #tpu.memory_space<vmem>>, vector<1x128x256xf32>
    %1 = vector.shape_cast %0 : vector<1x128x256xf32> to vector<128x256xf32>
    %c0_2 = arith.constant 0 : index
    %c0_3 = arith.constant 0 : index
    %2 = vector.load %arg3[%c0_2, %c0_3] : memref<1x256xf32, #tpu.memory_space<vmem>>, vector<1x256xf32>
    %c0_4 = arith.constant 0 : index
    %c0_5 = arith.constant 0 : index
    %3 = vector.load %arg4[%c0_4, %c0_5] : memref<1x256xf32, #tpu.memory_space<vmem>>, vector<1x256xf32>
    %cst = arith.constant dense<0.000000e+00> : vector<128xf32>
    %4 = vector.multi_reduction <add>, %1, %cst [1] : vector<128x256xf32> to vector<128xf32>
    %5 = vector.shape_cast %4 : vector<128xf32> to vector<128x1xf32>
    %cst_6 = arith.constant 2.560000e+02 : f32
    %6 = vector.broadcast %cst_6 : f32 to vector<128x1xf32>
    %7 = arith.divf %5, %6 : vector<128x1xf32>
    %8 = vector.broadcast %7 : vector<128x1xf32> to vector<128x256xf32>
    %9 = arith.subf %1, %8 : vector<128x256xf32>
    %10 = arith.mulf %9, %9 : vector<128x256xf32>
    %cst_7 = arith.constant dense<0.000000e+00> : vector<128xf32>
    %11 = vector.multi_reduction <add>, %10, %cst_7 [1] : vector<128x256xf32> to vector<128xf32>
    %12 = vector.shape_cast %11 : vector<128xf32> to vector<128x1xf32>
    %cst_8 = arith.constant 2.560000e+02 : f32
    %13 = vector.broadcast %cst_8 : f32 to vector<128x1xf32>
    %14 = arith.divf %12, %13 : vector<128x1xf32>
    %15 = vector.broadcast %7 : vector<128x1xf32> to vector<128x256xf32>
    %16 = arith.subf %1, %15 : vector<128x256xf32>
    %cst_9 = arith.constant 9.99999974E-6 : f32
    %17 = vector.broadcast %cst_9 : f32 to vector<128x1xf32>
    %18 = arith.addf %14, %17 : vector<128x1xf32>
    %19 = math.rsqrt %18 : vector<128x1xf32>
    %20 = vector.broadcast %19 : vector<128x1xf32> to vector<128x256xf32>
    %21 = arith.mulf %16, %20 : vector<128x256xf32>
    %22 = vector.broadcast %2 : vector<1x256xf32> to vector<128x256xf32>
    %23 = arith.mulf %21, %22 : vector<128x256xf32>
    %24 = vector.broadcast %3 : vector<1x256xf32> to vector<128x256xf32>
    %25 = arith.addf %23, %24 : vector<128x256xf32>
    %c0_10 = arith.constant 0 : index
    %c0_11 = arith.constant 0 : index
    %26 = vector.load %arg5[%c0_10, %c0_11] : memref<256x256xf32, #tpu.memory_space<vmem>>, vector<256x256xf32>
    %cst_12 = arith.constant dense<0.000000e+00> : vector<128x256xf32>
    %27 = tpu.matmul %25, %26, %cst_12 {dimension_numbers = #tpu.dot_dimension_numbers<[1], [0], [0], [1], [0, 0, 1, 1], [], []>} : vector<128x256xf32>, vector<256x256xf32>, vector<128x256xf32> -> vector<128x256xf32>
    %c0_13 = arith.constant 0 : index
    %c0_14 = arith.constant 0 : index
    %28 = vector.load %arg6[%c0_13, %c0_14] : memref<1x256xf32, #tpu.memory_space<vmem>>, vector<1x256xf32>
    %29 = vector.broadcast %28 : vector<1x256xf32> to vector<128x256xf32>
    %30 = arith.addf %27, %29 : vector<128x256xf32>
    %cst_15 = arith.constant 0.0883883461 : f32
    %31 = vector.broadcast %cst_15 : f32 to vector<128x256xf32>
    %32 = arith.mulf %30, %31 : vector<128x256xf32>
    %c0_16 = arith.constant 0 : index
    %c0_17 = arith.constant 0 : index
    %33 = vector.load %arg7[%c0_16, %c0_17] : memref<256x256xf32, #tpu.memory_space<vmem>>, vector<256x256xf32>
    %cst_18 = arith.constant dense<0.000000e+00> : vector<128x256xf32>
    %34 = tpu.matmul %25, %33, %cst_18 {dimension_numbers = #tpu.dot_dimension_numbers<[1], [0], [0], [1], [0, 0, 1, 1], [], []>} : vector<128x256xf32>, vector<256x256xf32>, vector<128x256xf32> -> vector<128x256xf32>
    %c0_19 = arith.constant 0 : index
    %c0_20 = arith.constant 0 : index
    %35 = vector.load %arg8[%c0_19, %c0_20] : memref<1x256xf32, #tpu.memory_space<vmem>>, vector<1x256xf32>
    %36 = vector.broadcast %35 : vector<1x256xf32> to vector<128x256xf32>
    %37 = arith.addf %34, %36 : vector<128x256xf32>
    %c0_21 = arith.constant 0 : index
    %c0_22 = arith.constant 0 : index
    %38 = vector.load %arg9[%c0_21, %c0_22] : memref<256x256xf32, #tpu.memory_space<vmem>>, vector<256x256xf32>
    %cst_23 = arith.constant dense<0.000000e+00> : vector<128x256xf32>
    %39 = tpu.matmul %25, %38, %cst_23 {dimension_numbers = #tpu.dot_dimension_numbers<[1], [0], [0], [1], [0, 0, 1, 1], [], []>} : vector<128x256xf32>, vector<256x256xf32>, vector<128x256xf32> -> vector<128x256xf32>
    %c0_24 = arith.constant 0 : index
    %c0_25 = arith.constant 0 : index
    %40 = vector.load %arg10[%c0_24, %c0_25] : memref<1x256xf32, #tpu.memory_space<vmem>>, vector<1x256xf32>
    %41 = vector.broadcast %40 : vector<1x256xf32> to vector<128x256xf32>
    %42 = arith.addf %39, %41 : vector<128x256xf32>
    %43 = vector.extract_strided_slice %32 {offsets = [0, 0], sizes = [128, 128], strides = [1, 1]} : vector<128x256xf32> to vector<128x128xf32>
    %c0_26 = arith.constant 0 : index
    %c0_27 = arith.constant 0 : index
    %c0_28 = arith.constant 0 : index
    %c0_29 = arith.constant 0 : index
    %44 = vector.load %arg11[%c0_26, %c0_27, %c0_28, %c0_29] : memref<1x2x128x128xf32, #tpu.memory_space<vmem>>, vector<1x1x128x128xf32>
    %45 = vector.shape_cast %44 : vector<1x1x128x128xf32> to vector<128x128xf32>
    %46 = vector.shape_cast %43 : vector<128x128xf32> to vector<1x1x128x128xf32>
    tpu.vector_store %arg11[%c0_26, %c0_27, %c0_28, %c0_29], %46 {strides = array<i32>} : memref<1x2x128x128xf32, #tpu.memory_space<vmem>>, vector<1x1x128x128xf32>,
    %47 = vector.extract_strided_slice %37 {offsets = [0, 0], sizes = [128, 128], strides = [1, 1]} : vector<128x256xf32> to vector<128x128xf32>
    %c0_30 = arith.constant 0 : index
    %c0_31 = arith.constant 0 : index
    %c0_32 = arith.constant 0 : index
    %c0_33 = arith.constant 0 : index
    %48 = vector.load %arg12[%c0_30, %c0_31, %c0_32, %c0_33] : memref<1x2x128x128xf32, #tpu.memory_space<vmem>>, vector<1x1x128x128xf32>
    %49 = vector.shape_cast %48 : vector<1x1x128x128xf32> to vector<128x128xf32>
    %50 = vector.shape_cast %47 : vector<128x128xf32> to vector<1x1x128x128xf32>
    tpu.vector_store %arg12[%c0_30, %c0_31, %c0_32, %c0_33], %50 {strides = array<i32>} : memref<1x2x128x128xf32, #tpu.memory_space<vmem>>, vector<1x1x128x128xf32>,
    %51 = vector.extract_strided_slice %42 {offsets = [0, 0], sizes = [128, 128], strides = [1, 1]} : vector<128x256xf32> to vector<128x128xf32>
    %c0_34 = arith.constant 0 : index
    %c0_35 = arith.constant 0 : index
    %c0_36 = arith.constant 0 : index
    %c0_37 = arith.constant 0 : index
    %52 = vector.load %arg13[%c0_34, %c0_35, %c0_36, %c0_37] : memref<1x2x128x128xf32, #tpu.memory_space<vmem>>, vector<1x1x128x128xf32>
    %53 = vector.shape_cast %52 : vector<1x1x128x128xf32> to vector<128x128xf32>
    %54 = vector.shape_cast %51 : vector<128x128xf32> to vector<1x1x128x128xf32>
    tpu.vector_store %arg13[%c0_34, %c0_35, %c0_36, %c0_37], %54 {strides = array<i32>} : memref<1x2x128x128xf32, #tpu.memory_space<vmem>>, vector<1x1x128x128xf32>,
    %55 = vector.extract_strided_slice %32 {offsets = [0, 128], sizes = [128, 128], strides = [1, 1]} : vector<128x256xf32> to vector<128x128xf32>
    %c0_38 = arith.constant 0 : index
    %c1 = arith.constant 1 : index
    %c0_39 = arith.constant 0 : index
    %c0_40 = arith.constant 0 : index
    %56 = vector.load %arg11[%c0_38, %c1, %c0_39, %c0_40] : memref<1x2x128x128xf32, #tpu.memory_space<vmem>>, vector<1x1x128x128xf32>
    %57 = vector.shape_cast %56 : vector<1x1x128x128xf32> to vector<128x128xf32>
    %58 = vector.shape_cast %55 : vector<128x128xf32> to vector<1x1x128x128xf32>
    tpu.vector_store %arg11[%c0_38, %c1, %c0_39, %c0_40], %58 {strides = array<i32>} : memref<1x2x128x128xf32, #tpu.memory_space<vmem>>, vector<1x1x128x128xf32>,
    %59 = vector.extract_strided_slice %37 {offsets = [0, 128], sizes = [128, 128], strides = [1, 1]} : vector<128x256xf32> to vector<128x128xf32>
    %c0_41 = arith.constant 0 : index
    %c1_42 = arith.constant 1 : index
    %c0_43 = arith.constant 0 : index
    %c0_44 = arith.constant 0 : index
    %60 = vector.load %arg12[%c0_41, %c1_42, %c0_43, %c0_44] : memref<1x2x128x128xf32, #tpu.memory_space<vmem>>, vector<1x1x128x128xf32>
    %61 = vector.shape_cast %60 : vector<1x1x128x128xf32> to vector<128x128xf32>
    %62 = vector.shape_cast %59 : vector<128x128xf32> to vector<1x1x128x128xf32>
    tpu.vector_store %arg12[%c0_41, %c1_42, %c0_43, %c0_44], %62 {strides = array<i32>} : memref<1x2x128x128xf32, #tpu.memory_space<vmem>>, vector<1x1x128x128xf32>,
    %63 = vector.extract_strided_slice %42 {offsets = [0, 128], sizes = [128, 128], strides = [1, 1]} : vector<128x256xf32> to vector<128x128xf32>
    %c0_45 = arith.constant 0 : index
    %c1_46 = arith.constant 1 : index
    %c0_47 = arith.constant 0 : index
    %c0_48 = arith.constant 0 : index
    %64 = vector.load %arg13[%c0_45, %c1_46, %c0_47, %c0_48] : memref<1x2x128x128xf32, #tpu.memory_space<vmem>>, vector<1x1x128x128xf32>
    %65 = vector.shape_cast %64 : vector<1x1x128x128xf32> to vector<128x128xf32>
    %66 = vector.shape_cast %63 : vector<128x128xf32> to vector<1x1x128x128xf32>
    tpu.vector_store %arg13[%c0_45, %c1_46, %c0_47, %c0_48], %66 {strides = array<i32>} : memref<1x2x128x128xf32, #tpu.memory_space<vmem>>, vector<1x1x128x128xf32>,
    return
  }
  func.func @transform_0(%arg0: i32, %arg1: i32) -> (i32, i32, i32) {
    %c0_i32 = arith.constant 0 : i32
    %c0_i32_0 = arith.constant 0 : i32
    return %arg0, %arg1, %c0_i32 : i32, i32, i32
  }
  func.func @transform_1(%arg0: i32, %arg1: i32) -> (i32, i32) {
    %c0_i32 = arith.constant 0 : i32
    %c0_i32_0 = arith.constant 0 : i32
    %c0_i32_1 = arith.constant 0 : i32
    return %c0_i32, %c0_i32_0 : i32, i32
  }
  func.func @transform_2(%arg0: i32, %arg1: i32) -> (i32, i32) {
    %c0_i32 = arith.constant 0 : i32
    %c0_i32_0 = arith.constant 0 : i32
    %c0_i32_1 = arith.constant 0 : i32
    return %c0_i32, %c0_i32_0 : i32, i32
  }
  func.func @transform_3(%arg0: i32, %arg1: i32) -> (i32, i32) {
    %c0_i32 = arith.constant 0 : i32
    %c0_i32_0 = arith.constant 0 : i32
    %c0_i32_1 = arith.constant 0 : i32
    return %c0_i32, %c0_i32_0 : i32, i32
  }
  func.func @transform_4(%arg0: i32, %arg1: i32) -> (i32, i32) {
    %c0_i32 = arith.constant 0 : i32
    %c0_i32_0 = arith.constant 0 : i32
    %c0_i32_1 = arith.constant 0 : i32
    return %c0_i32, %c0_i32_0 : i32, i32
  }
  func.func @transform_5(%arg0: i32, %arg1: i32) -> (i32, i32) {
    %c0_i32 = arith.constant 0 : i32
    %c0_i32_0 = arith.constant 0 : i32
    %c0_i32_1 = arith.constant 0 : i32
    return %c0_i32, %c0_i32_0 : i32, i32
  }
  func.func @transform_6(%arg0: i32, %arg1: i32) -> (i32, i32) {
    %c0_i32 = arith.constant 0 : i32
    %c0_i32_0 = arith.constant 0 : i32
    %c0_i32_1 = arith.constant 0 : i32
    return %c0_i32, %c0_i32_0 : i32, i32
  }
  func.func @transform_7(%arg0: i32, %arg1: i32) -> (i32, i32) {
    %c0_i32 = arith.constant 0 : i32
    %c0_i32_0 = arith.constant 0 : i32
    %c0_i32_1 = arith.constant 0 : i32
    return %c0_i32, %c0_i32_0 : i32, i32
  }
  func.func @transform_8(%arg0: i32, %arg1: i32) -> (i32, i32) {
    %c0_i32 = arith.constant 0 : i32
    %c0_i32_0 = arith.constant 0 : i32
    %c0_i32_1 = arith.constant 0 : i32
    return %c0_i32, %c0_i32_0 : i32, i32
  }
  func.func @transform_9(%arg0: i32, %arg1: i32) -> (i32, i32, i32, i32) {
    %c0_i32 = arith.constant 0 : i32
    %c0_i32_0 = arith.constant 0 : i32
    %c0_i32_1 = arith.constant 0 : i32
    return %arg0, %c0_i32, %arg1, %c0_i32_0 : i32, i32, i32, i32
  }
  func.func @transform_10(%arg0: i32, %arg1: i32) -> (i32, i32, i32, i32) {
    %c0_i32 = arith.constant 0 : i32
    %c0_i32_0 = arith.constant 0 : i32
    %c0_i32_1 = arith.constant 0 : i32
    return %arg0, %c0_i32, %arg1, %c0_i32_0 : i32, i32, i32, i32
  }
  func.func @transform_11(%arg0: i32, %arg1: i32) -> (i32, i32, i32, i32) {
    %c0_i32 = arith.constant 0 : i32
    %c0_i32_0 = arith.constant 0 : i32
    %c0_i32_1 = arith.constant 0 : i32
    return %arg0, %c0_i32, %arg1, %c0_i32_0 : i32, i32, i32, i32
  }
}

</mosaic_0001>

<llo_original>
// kernel: tpu_custom_call.1
$region0: #{tpu_custom_call.1}
  #allocation0 [shape = 'u32[]', space=smem, size = 0x4, offset = 0x4, fixed_abs, tag = 'smem constant byte address 0x4 - core index']
  #allocation1 [shape = 'u32[144,128]{1,0:T(1,128)}', space=vmem, size = 0x12000, scoped, tag = 'internal scratch']
  #allocation15 [shape = 's32[]', space=sflag, size = 0x4, offset = 0, fixed_abs, tag = 'sflag constant byte address 0x0 - dummy sync flag']
  #allocation17 [shape = 's32[]', space=sflag, size = 0x4, offset = 0, fixed_abs, tag = 'sflag constant byte address 0x0 - dummy sync flag']
  #allocation19 [shape = 's32[]', space=sflag, size = 0x4, offset = 0, fixed_abs, tag = 'sflag constant byte address 0x0 - dummy sync flag']
  %s0 = inlined_call_operand.hbm [shape: f32[2,256,256], index: 0, kind: input, shape index: {}]
  %s1 = inlined_call_operand.hbm [shape: f32[1,256], index: 1, kind: input, shape index: {}]
  %s2 = inlined_call_operand.vmem [shape: f32[1,256], index: 2, kind: input, shape index: {}]
  %s3 = inlined_call_operand.hbm [shape: f32[256,256], index: 3, kind: input, shape index: {}]
  %s4 = inlined_call_operand.vmem [shape: f32[1,256], index: 4, kind: input, shape index: {}]
  %s5 = inlined_call_operand.hbm [shape: f32[256,256], index: 5, kind: input, shape index: {}]
  %s6 = inlined_call_operand.vmem [shape: f32[1,256], index: 6, kind: input, shape index: {}]
  %s7 = inlined_call_operand.hbm [shape: f32[256,256], index: 7, kind: input, shape index: {}]
  %s8 = inlined_call_operand.vmem [shape: f32[1,256], index: 8, kind: input, shape index: {}]
  %s9 = inlined_call_operand.hbm [shape: f32[2,2,256,128], index: 9, kind: output, shape index: {0}]
  %s10 = inlined_call_operand.hbm [shape: f32[2,2,256,128], index: 10, kind: output, shape index: {1}]
  %s11 = inlined_call_operand.hbm [shape: f32[2,2,256,128], index: 11, kind: output, shape index: {2}]
  %12 = xla_tuple %s9, %s10, %s11
  %s13 = sld [smem:[#allocation0]]
  $region105: #{tpu_custom_call.1} parent=0
    _
  %s15 = ssub.s32 1, %s13
  %s16 = scalar_select 0, %s15, %s13
  $region1: #{tpu_custom_call.1} parent=0
    #allocation2 [shape = 'u8[262144]{0}', space=vmem, size = 0x40000, scoped, tag = 'input window, operand 0']
    #allocation3 [shape = 's32[2]{0}', space=sflag, size = 0x8, scoped, tag = 'scoped memory for tpu_custom_call.1']
    #allocation4 [shape = 's32[2]{0}', space=sflag, size = 0x8, scoped, tag = 'scoped memory for tpu_custom_call.1']
    #allocation5 [shape = 'u8[1024]{0}', space=vmem, size = 0x400, scoped, tag = 'input window, operand 1, single buffered']
    #allocation6 [shape = 's32[1]{0}', space=sflag, size = 0x4, scoped, tag = 'scoped memory for tpu_custom_call.1']
    #allocation7 [shape = 'u8[262144]{0}', space=vmem, size = 0x40000, scoped, tag = 'input window, operand 3, single buffered']
    #allocation8 [shape = 'u8[262144]{0}', space=vmem, size = 0x40000, scoped, tag = 'input window, operand 5, single buffered']
    #allocation9 [shape = 's32[1]{0}', space=sflag, size = 0x4, scoped, tag = 'scoped memory for tpu_custom_call.1']
    #allocation10 [shape = 'u8[262144]{0}', space=vmem, size = 0x40000, scoped, tag = 'input window, operand 7, single buffered']
    #allocation11 [shape = 'u8[262144]{0}', space=vmem, size = 0x40000, scoped, tag = 'output window, operand 0']
    #allocation12 [shape = 'u8[262144]{0}', space=vmem, size = 0x40000, scoped, tag = 'output window, operand 1']
    #allocation13 [shape = 's32[2]{0}', space=sflag, size = 0x8, scoped, tag = 'scoped memory for tpu_custom_call.1']
    #allocation14 [shape = 'u8[262144]{0}', space=vmem, size = 0x40000, scoped, tag = 'output window, operand 2']
    %17 = vsyncpa [#allocation3], 0
    %s18 = scalar_lea.sflag [#allocation3], 1
    %19 = vsyncpa %s18, 0
    %20 = vsyncpa [#allocation6], 0
    %21 = vsyncpa [#allocation9], 0
    %22 = vsyncpa [#allocation4], 0
    %s23 = scalar_lea.sflag [#allocation4], 1
    %24 = vsyncpa %s23, 0
    %25 = vsyncpa [#allocation13], 0
    %s26 = scalar_lea.sflag [#allocation13], 1
    %27 = vsyncpa %s26, 0
    loop: start=0, step=1, limit=6
    $region2: #{tpu_custom_call.1} parent=1 // loop_pre_header
      _
    $region3: #{tpu_custom_call.1} parent=1 // loop_header
      %s29 = sphi 0, %s33
      %p30 = scmp.ge.s32.totalorder %s29, 6
      %s36 = sphi 0, %s48
      %s37 = sphi 0, %s44
      %s38 = sphi 0, %s36
      %s39 = sphi 0, %s37
      %s40 = sphi 0, %s38
      %s41 = sphi 0, %s39
      %s53 = sphi 0, %s55
      %s56 = sphi 0, %s53
      %s57 = sphi 0, %s56
      %s73 = sphi 0, %s57
      %s77 = sphi 0, %s77
      %s79 = sphi 0, %s77
      %s80 = sphi 0, %s79
      %s94 = sphi 0, %s80
      %s98 = sphi 0, %s98
      %s100 = sphi 0, %s98
      %s101 = sphi 0, %s100
      %s115 = sphi 0, %s101
      %s119 = sphi 0, %s119
      %s121 = sphi 0, %s119
      %s122 = sphi 0, %s121
      %s136 = sphi 0, %s122
      %s140 = sphi 0, %s140
      %s142 = sphi 0, %s140
      %s143 = sphi 0, %s142
      %s157 = sphi 0, %s143
      %s161 = sphi 0, %s161
      %s163 = sphi 0, %s161
      %s164 = sphi 0, %s163
      %s178 = sphi 0, %s164
      %s182 = sphi 0, %s182
      %s184 = sphi 0, %s182
      %s185 = sphi 0, %s184
      %s199 = sphi 0, %s185
      %s203 = sphi 0, %s203
      %s205 = sphi 0, %s203
      %s206 = sphi 0, %s205
      %s220 = sphi 0, %s206
      %s224 = sphi 0, %s224
      %s226 = sphi 0, %s224
      %s227 = sphi 0, %s226
      %s241 = sphi 0, %s227
      %s249 = sphi 0, %s251
      %s252 = sphi 0, %s249
      %s253 = sphi 0, %s252
      %s269 = sphi 0, %s253
      %s277 = sphi 0, %s279
      %s280 = sphi 0, %s277
      %s281 = sphi 0, %s280
      %s297 = sphi 0, %s281
      %s305 = sphi 0, %s307
      %s308 = sphi 0, %s305
      %s309 = sphi 0, %s308
      %s325 = sphi 0, %s309
    $region4: #{tpu_custom_call.1} parent=1 // loop_header_branch
      %32 = sbr.rel (%p30) target = $region8
    $region5: #{tpu_custom_call.1} parent=1 // loop_body
      %s34 = ssub.s32 %s29, 1
      %s35 = ssub.s32 %s29, 2
      %s42 = sadd.s32 1, %s37
      %p43 = scmp.ge.s32.totalorder %s42, 2
      %s44 = scalar_select %p43, 0, %s42
      %s45 = sadd.s32 1, %s36
      %s46 = scalar_select %p43, %s45, %s36
      %p47 = scmp.ge.s32.totalorder %s46, 2
      %s48 = scalar_select %p47, 0, %s46
      %s49 = ssub.s32 %s36, %s48
      %s50 = ssub.s32 %s37, %s44
      %s51 = sor.u32 %s49, %s50
      %p52 = scmp.eq.s32.totalorder %s51, 0
      %s54 = sadd.s32 %s53, 1
      %s55 = scalar_select %p52, %s53, %s54
      %p58 = pneg %p52
      %p59 = scmp.eq.s32.totalorder %s29, 3
      %p60 = por %p58, %p59
      %p61 = scmp.ne.s32.totalorder %s53, %s56
      %p62 = scmp.eq.s32.totalorder %s29, 0
      %p63 = por %p61, %p62
      %p64 = scmp.ne.s32.totalorder %s53, %s56
      %p65 = scmp.eq.s32.totalorder %s34, 3
      %p66 = por %p64, %p65
      %p67 = scmp.ne.s32.totalorder %s56, %s57
      %p68 = scmp.eq.s32.totalorder %s34, 0
      %p69 = por %p67, %p68
      %p70 = scmp.ne.s32.totalorder %s56, %s57
      %p71 = scmp.eq.s32.totalorder %s35, 3
      %p72 = por %p70, %p71
      %p74 = scmp.ne.s32.totalorder %s57, %s73
      %p75 = scmp.eq.s32.totalorder %s35, 0
      %p76 = por %p74, %p75
      %s78 = sadd.s32 %s77, 1
      %p81 = scmp.eq.s32.totalorder %s29, 3
      %p82 = scmp.ne.s32.totalorder %s77, %s79
      %p83 = scmp.eq.s32.totalorder %s29, 0
      %p84 = por %p82, %p83
      %p85 = scmp.ne.s32.totalorder %s77, %s79
      %p86 = scmp.eq.s32.totalorder %s34, 3
      %p87 = por %p85, %p86
      %p88 = scmp.ne.s32.totalorder %s79, %s80
      %p89 = scmp.eq.s32.totalorder %s34, 0
      %p90 = por %p88, %p89
      %p91 = scmp.ne.s32.totalorder %s79, %s80
      %p92 = scmp.eq.s32.totalorder %s35, 3
      %p93 = por %p91, %p92
      %p95 = scmp.ne.s32.totalorder %s80, %s94
      %p96 = scmp.eq.s32.totalorder %s35, 0
      %p97 = por %p95, %p96
      %s99 = sadd.s32 %s98, 1
      %p102 = scmp.eq.s32.totalorder %s29, 3
      %p103 = scmp.ne.s32.totalorder %s98, %s100
      %p104 = scmp.eq.s32.totalorder %s29, 0
      %p105 = por %p103, %p104
      %p106 = scmp.ne.s32.totalorder %s98, %s100
      %p107 = scmp.eq.s32.totalorder %s34, 3
      %p108 = por %p106, %p107
      %p109 = scmp.ne.s32.totalorder %s100, %s101
      %p110 = scmp.eq.s32.totalorder %s34, 0
      %p111 = por %p109, %p110
      %p112 = scmp.ne.s32.totalorder %s100, %s101
      %p113 = scmp.eq.s32.totalorder %s35, 3
      %p114 = por %p112, %p113
      %p116 = scmp.ne.s32.totalorder %s101, %s115
      %p117 = scmp.eq.s32.totalorder %s35, 0
      %p118 = por %p116, %p117
      %s120 = sadd.s32 %s119, 1
      %p123 = scmp.eq.s32.totalorder %s29, 3
      %p124 = scmp.ne.s32.totalorder %s119, %s121
      %p125 = scmp.eq.s32.totalorder %s29, 0
      %p126 = por %p124, %p125
      %p127 = scmp.ne.s32.totalorder %s119, %s121
      %p128 = scmp.eq.s32.totalorder %s34, 3
      %p129 = por %p127, %p128
      %p130 = scmp.ne.s32.totalorder %s121, %s122
      %p131 = scmp.eq.s32.totalorder %s34, 0
      %p132 = por %p130, %p131
      %p133 = scmp.ne.s32.totalorder %s121, %s122
      %p134 = scmp.eq.s32.totalorder %s35, 3
      %p135 = por %p133, %p134
      %p137 = scmp.ne.s32.totalorder %s122, %s136
      %p138 = scmp.eq.s32.totalorder %s35, 0
      %p139 = por %p137, %p138
      %s141 = sadd.s32 %s140, 1
      %p144 = scmp.eq.s32.totalorder %s29, 3
      %p145 = scmp.ne.s32.totalorder %s140, %s142
      %p146 = scmp.eq.s32.totalorder %s29, 0
      %p147 = por %p145, %p146
      %p148 = scmp.ne.s32.totalorder %s140, %s142
      %p149 = scmp.eq.s32.totalorder %s34, 3
      %p150 = por %p148, %p149
      %p151 = scmp.ne.s32.totalorder %s142, %s143
      %p152 = scmp.eq.s32.totalorder %s34, 0
      %p153 = por %p151, %p152
      %p154 = scmp.ne.s32.totalorder %s142, %s143
      %p155 = scmp.eq.s32.totalorder %s35, 3
      %p156 = por %p154, %p155
      %p158 = scmp.ne.s32.totalorder %s143, %s157
      %p159 = scmp.eq.s32.totalorder %s35, 0
      %p160 = por %p158, %p159
      %s162 = sadd.s32 %s161, 1
      %p165 = scmp.eq.s32.totalorder %s29, 3
      %p166 = scmp.ne.s32.totalorder %s161, %s163
      %p167 = scmp.eq.s32.totalorder %s29, 0
      %p168 = por %p166, %p167
      %p169 = scmp.ne.s32.totalorder %s161, %s163
      %p170 = scmp.eq.s32.totalorder %s34, 3
      %p171 = por %p169, %p170
      %p172 = scmp.ne.s32.totalorder %s163, %s164
      %p173 = scmp.eq.s32.totalorder %s34, 0
      %p174 = por %p172, %p173
      %p175 = scmp.ne.s32.totalorder %s163, %s164
      %p176 = scmp.eq.s32.totalorder %s35, 3
      %p177 = por %p175, %p176
      %p179 = scmp.ne.s32.totalorder %s164, %s178
      %p180 = scmp.eq.s32.totalorder %s35, 0
      %p181 = por %p179, %p180
      %s183 = sadd.s32 %s182, 1
      %p186 = scmp.eq.s32.totalorder %s29, 3
      %p187 = scmp.ne.s32.totalorder %s182, %s184
      %p188 = scmp.eq.s32.totalorder %s29, 0
      %p189 = por %p187, %p188
      %p190 = scmp.ne.s32.totalorder %s182, %s184
      %p191 = scmp.eq.s32.totalorder %s34, 3
      %p192 = por %p190, %p191
      %p193 = scmp.ne.s32.totalorder %s184, %s185
      %p194 = scmp.eq.s32.totalorder %s34, 0
      %p195 = por %p193, %p194
      %p196 = scmp.ne.s32.totalorder %s184, %s185
      %p197 = scmp.eq.s32.totalorder %s35, 3
      %p198 = por %p196, %p197
      %p200 = scmp.ne.s32.totalorder %s185, %s199
      %p201 = scmp.eq.s32.totalorder %s35, 0
      %p202 = por %p200, %p201
      %s204 = sadd.s32 %s203, 1
      %p207 = scmp.eq.s32.totalorder %s29, 3
      %p208 = scmp.ne.s32.totalorder %s203, %s205
      %p209 = scmp.eq.s32.totalorder %s29, 0
      %p210 = por %p208, %p209
      %p211 = scmp.ne.s32.totalorder %s203, %s205
      %p212 = scmp.eq.s32.totalorder %s34, 3
      %p213 = por %p211, %p212
      %p214 = scmp.ne.s32.totalorder %s205, %s206
      %p215 = scmp.eq.s32.totalorder %s34, 0
      %p216 = por %p214, %p215
      %p217 = scmp.ne.s32.totalorder %s205, %s206
      %p218 = scmp.eq.s32.totalorder %s35, 3
      %p219 = por %p217, %p218
      %p221 = scmp.ne.s32.totalorder %s206, %s220
      %p222 = scmp.eq.s32.totalorder %s35, 0
      %p223 = por %p221, %p222
      %s225 = sadd.s32 %s224, 1
      %p228 = scmp.eq.s32.totalorder %s29, 3
      %p229 = scmp.ne.s32.totalorder %s224, %s226
      %p230 = scmp.eq.s32.totalorder %s29, 0
      %p231 = por %p229, %p230
      %p232 = scmp.ne.s32.totalorder %s224, %s226
      %p233 = scmp.eq.s32.totalorder %s34, 3
      %p234 = por %p232, %p233
      %p235 = scmp.ne.s32.totalorder %s226, %s227
      %p236 = scmp.eq.s32.totalorder %s34, 0
      %p237 = por %p235, %p236
      %p238 = scmp.ne.s32.totalorder %s226, %s227
      %p239 = scmp.eq.s32.totalorder %s35, 3
      %p240 = por %p238, %p239
      %p242 = scmp.ne.s32.totalorder %s227, %s241
      %p243 = scmp.eq.s32.totalorder %s35, 0
      %p244 = por %p242, %p243
      %s245 = ssub.s32 %s36, %s48
      %s246 = ssub.s32 %s37, %s44
      %s247 = sor.u32 %s245, %s246
      %p248 = scmp.eq.s32.totalorder %s247, 0
      %s250 = sadd.s32 %s249, 1
      %s251 = scalar_select %p248, %s249, %s250
      %p254 = pneg %p248
      %p255 = scmp.eq.s32.totalorder %s29, 3
      %p256 = por %p254, %p255
      %p257 = scmp.ne.s32.totalorder %s249, %s252
      %p258 = scmp.eq.s32.totalorder %s29, 0
      %p259 = por %p257, %p258
      %p260 = scmp.ne.s32.totalorder %s249, %s252
      %p261 = scmp.eq.s32.totalorder %s34, 3
      %p262 = por %p260, %p261
      %p263 = scmp.ne.s32.totalorder %s252, %s253
      %p264 = scmp.eq.s32.totalorder %s34, 0
      %p265 = por %p263, %p264
      %p266 = scmp.ne.s32.totalorder %s252, %s253
      %p267 = scmp.eq.s32.totalorder %s35, 3
      %p268 = por %p266, %p267
      %p270 = scmp.ne.s32.totalorder %s253, %s269
      %p271 = scmp.eq.s32.totalorder %s35, 0
      %p272 = por %p270, %p271
      %s273 = ssub.s32 %s36, %s48
      %s274 = ssub.s32 %s37, %s44
      %s275 = sor.u32 %s273, %s274
      %p276 = scmp.eq.s32.totalorder %s275, 0
      %s278 = sadd.s32 %s277, 1
      %s279 = scalar_select %p276, %s277, %s278
      %p282 = pneg %p276
      %p283 = scmp.eq.s32.totalorder %s29, 3
      %p284 = por %p282, %p283
      %p285 = scmp.ne.s32.totalorder %s277, %s280
      %p286 = scmp.eq.s32.totalorder %s29, 0
      %p287 = por %p285, %p286
      %p288 = scmp.ne.s32.totalorder %s277, %s280
      %p289 = scmp.eq.s32.totalorder %s34, 3
      %p290 = por %p288, %p289
      %p291 = scmp.ne.s32.totalorder %s280, %s281
      %p292 = scmp.eq.s32.totalorder %s34, 0
      %p293 = por %p291, %p292
      %p294 = scmp.ne.s32.totalorder %s280, %s281
      %p295 = scmp.eq.s32.totalorder %s35, 3
      %p296 = por %p294, %p295
      %p298 = scmp.ne.s32.totalorder %s281, %s297
      %p299 = scmp.eq.s32.totalorder %s35, 0
      %p300 = por %p298, %p299
      %s301 = ssub.s32 %s36, %s48
      %s302 = ssub.s32 %s37, %s44
      %s303 = sor.u32 %s301, %s302
      %p304 = scmp.eq.s32.totalorder %s303, 0
      %s306 = sadd.s32 %s305, 1
      %s307 = scalar_select %p304, %s305, %s306
      %p310 = pneg %p304
      %p311 = scmp.eq.s32.totalorder %s29, 3
      %p312 = por %p310, %p311
      %p313 = scmp.ne.s32.totalorder %s305, %s308
      %p314 = scmp.eq.s32.totalorder %s29, 0
      %p315 = por %p313, %p314
      %p316 = scmp.ne.s32.totalorder %s305, %s308
      %p317 = scmp.eq.s32.totalorder %s34, 3
      %p318 = por %p316, %p317
      %p319 = scmp.ne.s32.totalorder %s308, %s309
      %p320 = scmp.eq.s32.totalorder %s34, 0
      %p321 = por %p319, %p320
      %p322 = scmp.ne.s32.totalorder %s308, %s309
      %p323 = scmp.eq.s32.totalorder %s35, 3
      %p324 = por %p322, %p323
      %p326 = scmp.ne.s32.totalorder %s309, %s325
      %p327 = scmp.eq.s32.totalorder %s35, 0
      %p328 = por %p326, %p327
      %p329 = scmp.le.s32.totalorder 1, %s29
      %p330 = scmp.lt.s32.totalorder %s29, 5
      %p331 = pnand %p329, %p330
      %p332 = pneg %p331
      // Predicated region
      $region9: #{tpu_custom_call.1} parent=5 // pred_check
        _
      $region10: #{tpu_custom_call.1} parent=5 // pred_check_branch
        %334 = sbr.rel (%p331) target = $region12
      $region11: #{tpu_custom_call.1} parent=5 // pred_region
        %s335 = ssub.s32 %s29, 1
        // Predicated region
        $region13: #{tpu_custom_call.1} parent=11 // pred_check
          %p336 = pneg %p90
        $region14: #{tpu_custom_call.1} parent=11 // pred_check_branch
          %338 = sbr.rel (%p336) target = $region16
        $region15: #{tpu_custom_call.1} parent=11 // pred_region
          %s340 = ssub.s32 32, 32
          %341 = vsyncadd [#allocation6], %s340
          %s343 = sshll.u32 [#allocation5], 4
          %s344 = int_to_ptr.vmem [resolvable:$true] %s343
          %346 = dma.hbm_to_vmem [thread:$0]  %s1, 32, %s344, [#allocation6]
        $region16: #{tpu_custom_call.1} parent=11 // pred_fallthru
          _
        // Predicated region
        $region17: #{tpu_custom_call.1} parent=11 // pred_check
          %p347 = pneg %p111
        $region18: #{tpu_custom_call.1} parent=11 // pred_check_branch
          %349 = sbr.rel (%p347) target = $region20
        $region19: #{tpu_custom_call.1} parent=11 // pred_region
          _
        $region20: #{tpu_custom_call.1} parent=11 // pred_fallthru
          _
        // Predicated region
        $region21: #{tpu_custom_call.1} parent=11 // pred_check
          %p350 = pneg %p132
        $region22: #{tpu_custom_call.1} parent=11 // pred_check_branch
          %352 = sbr.rel (%p350) target = $region24
        $region23: #{tpu_custom_call.1} parent=11 // pred_region
          %s354 = ssub.s32 8192, 8192
          %355 = vsyncadd [#allocation6], %s354
          %s356 = sshll.u32 [#allocation7], 4
          %s357 = int_to_ptr.vmem [resolvable:$true] %s356
          %362 = dma.hbm_to_vmem [thread:$0]  %s3, 8192, %s357, [#allocation6], 256, 256, 16
        $region24: #{tpu_custom_call.1} parent=11 // pred_fallthru
          _
        // Predicated region
        $region25: #{tpu_custom_call.1} parent=11 // pred_check
          %p363 = pneg %p153
        $region26: #{tpu_custom_call.1} parent=11 // pred_check_branch
          %365 = sbr.rel (%p363) target = $region28
        $region27: #{tpu_custom_call.1} parent=11 // pred_region
          _
        $region28: #{tpu_custom_call.1} parent=11 // pred_fallthru
          _
        // Predicated region
        $region29: #{tpu_custom_call.1} parent=11 // pred_check
          %p366 = pneg %p174
        $region30: #{tpu_custom_call.1} parent=11 // pred_check_branch
          %368 = sbr.rel (%p366) target = $region32
        $region31: #{tpu_custom_call.1} parent=11 // pred_region
          %s370 = ssub.s32 8192, 8192
          %371 = vsyncadd [#allocation9], %s370
          %s372 = sshll.u32 [#allocation8], 4
          %s373 = int_to_ptr.vmem [resolvable:$true] %s372
          %378 = dma.hbm_to_vmem [thread:$0]  %s5, 8192, %s373, [#allocation9], 256, 256, 16
        $region32: #{tpu_custom_call.1} parent=11 // pred_fallthru
          _
        // Predicated region
        $region33: #{tpu_custom_call.1} parent=11 // pred_check
          %p379 = pneg %p195
        $region34: #{tpu_custom_call.1} parent=11 // pred_check_branch
          %381 = sbr.rel (%p379) target = $region36
        $region35: #{tpu_custom_call.1} parent=11 // pred_region
          _
        $region36: #{tpu_custom_call.1} parent=11 // pred_fallthru
          _
        // Predicated region
        $region37: #{tpu_custom_call.1} parent=11 // pred_check
          %p382 = pneg %p216
        $region38: #{tpu_custom_call.1} parent=11 // pred_check_branch
          %384 = sbr.rel (%p382) target = $region40
        $region39: #{tpu_custom_call.1} parent=11 // pred_region
          %s386 = ssub.s32 8192, 8192
          %387 = vsyncadd [#allocation9], %s386
          %s388 = sshll.u32 [#allocation10], 4
          %s389 = int_to_ptr.vmem [resolvable:$true] %s388
          %394 = dma.hbm_to_vmem [thread:$0]  %s7, 8192, %s389, [#allocation9], 256, 256, 16
        $region40: #{tpu_custom_call.1} parent=11 // pred_fallthru
          _
        // Predicated region
        $region41: #{tpu_custom_call.1} parent=11 // pred_check
          %p395 = pneg %p237
        $region42: #{tpu_custom_call.1} parent=11 // pred_check_branch
          %397 = sbr.rel (%p395) target = $region44
        $region43: #{tpu_custom_call.1} parent=11 // pred_region
          _
        $region44: #{tpu_custom_call.1} parent=11 // pred_fallthru
          _
      $region12: #{tpu_custom_call.1} parent=5 // pred_fallthru
        _
      %p398 = scmp.lt.s32.totalorder %s29, 4
      // Predicated region
      $region45: #{tpu_custom_call.1} parent=5 // pred_check
        %p399 = pneg %p398
      $region46: #{tpu_custom_call.1} parent=5 // pred_check_branch
        %401 = sbr.rel (%p399) target = $region48
      $region47: #{tpu_custom_call.1} parent=5 // pred_region
        // Predicated region
        $region49: #{tpu_custom_call.1} parent=47 // pred_check
          %p402 = pneg %p63
        $region50: #{tpu_custom_call.1} parent=47 // pred_check_branch
          %404 = sbr.rel (%p402) target = $region52
        $region51: #{tpu_custom_call.1} parent=47 // pred_region
          %s405 = sand.u32 %s53, 1
          %s406 = scalar_lea.sflag [#allocation3], %s405
          %s407 = sand.u32 %s53, 1
          %s408 = smul.addr %s407, 256
          %s409 = scalar_lea.vmem [#allocation2], %s408
          %s410 = smul.u32 16, %s37
          %s412 = ssub.s32 4096, 4096
          %413 = vsyncadd %s406, %s412
          %s414 = smul.addr %s410, 2
          %s415 = smul.addr %s36, 64
          %s416 = sadd.s32 %s414, %s415
          %s417 = smul.addr %s416, 128
          %s418 = scalar_lea.hbm %s0, %s417
          %s419 = sshll.u32 %s409, 4
          %s420 = int_to_ptr.vmem [resolvable:$true] %s419
          %425 = dma.hbm_to_vmem [thread:$0]  %s418, 4096, %s420, %s406, 256, 256, 16
        $region52: #{tpu_custom_call.1} parent=47 // pred_fallthru
          _
      $region48: #{tpu_custom_call.1} parent=5 // pred_fallthru
        _
      %p426 = scmp.le.s32.totalorder 1, %s29
      %p427 = scmp.lt.s32.totalorder %s29, 5
      %p428 = pnand %p426, %p427
      %p429 = pneg %p428
      // Predicated region
      $region53: #{tpu_custom_call.1} parent=5 // pred_check
        _
      $region54: #{tpu_custom_call.1} parent=5 // pred_check_branch
        %431 = sbr.rel (%p428) target = $region56
      $region55: #{tpu_custom_call.1} parent=5 // pred_region
        %s432 = ssub.s32 %s29, 1
        %s433 = sand.u32 %s56, 1
        %s434 = scalar_lea.sflag [#allocation3], %s433
        %s435 = sand.u32 %s56, 1
        %s436 = smul.addr %s435, 256
        %s437 = scalar_lea.vmem [#allocation2], %s436
        // Predicated region
        $region57: #{tpu_custom_call.1} parent=55 // pred_check
          %p438 = pneg %p69
        $region58: #{tpu_custom_call.1} parent=55 // pred_check_branch
          %440 = sbr.rel (%p438) target = $region60
        $region59: #{tpu_custom_call.1} parent=55 // pred_region
          %441 = dma.done %s434, 4096
        $region60: #{tpu_custom_call.1} parent=55 // pred_fallthru
          _
        // Predicated region
        $region61: #{tpu_custom_call.1} parent=55 // pred_check
          %p442 = pneg %p90
        $region62: #{tpu_custom_call.1} parent=55 // pred_check_branch
          %444 = sbr.rel (%p442) target = $region64
        $region63: #{tpu_custom_call.1} parent=55 // pred_region
          %445 = dma.done [#allocation6], 32
        $region64: #{tpu_custom_call.1} parent=55 // pred_fallthru
          _
        // Predicated region
        $region65: #{tpu_custom_call.1} parent=55 // pred_check
          %p446 = pneg %p132
        $region66: #{tpu_custom_call.1} parent=55 // pred_check_branch
          %448 = sbr.rel (%p446) target = $region68
        $region67: #{tpu_custom_call.1} parent=55 // pred_region
          %449 = dma.done [#allocation6], 8192
        $region68: #{tpu_custom_call.1} parent=55 // pred_fallthru
          _
        // Predicated region
        $region69: #{tpu_custom_call.1} parent=55 // pred_check
          %p450 = pneg %p174
        $region70: #{tpu_custom_call.1} parent=55 // pred_check_branch
          %452 = sbr.rel (%p450) target = $region72
        $region71: #{tpu_custom_call.1} parent=55 // pred_region
          %453 = dma.done [#allocation9], 8192
        $region72: #{tpu_custom_call.1} parent=55 // pred_fallthru
          _
        // Predicated region
        $region73: #{tpu_custom_call.1} parent=55 // pred_check
          %p454 = pneg %p216
        $region74: #{tpu_custom_call.1} parent=55 // pred_check_branch
          %456 = sbr.rel (%p454) target = $region76
        $region75: #{tpu_custom_call.1} parent=55 // pred_region
          %457 = dma.done [#allocation9], 8192
        $region76: #{tpu_custom_call.1} parent=55 // pred_fallthru
          _
        %s458 = sand.u32 %s56, 1
        %s459 = scalar_lea.sflag [#allocation3], %s458
        %s460 = sand.u32 %s56, 1
        %s461 = smul.addr %s460, 256
        %s462 = scalar_lea.vmem [#allocation2], %s461
        %p463 = pneg %p69
        %p464 = pneg %p66
        %p465 = pneg %p90
        %p466 = pneg %p87
        %p467 = pneg %p111
        %p468 = pneg %p108
        %p469 = pneg %p132
        %p470 = pneg %p129
        %p471 = pneg %p153
        %p472 = pneg %p150
        %p473 = pneg %p174
        %p474 = pneg %p171
        %p475 = pneg %p195
        %p476 = pneg %p192
        %p477 = pneg %p216
        %p478 = pneg %p213
        %p479 = pneg %p237
        %p480 = pneg %p234
        %p481 = pneg %p265
        %p482 = pneg %p262
        %s483 = sand.u32 %s252, 1
        %s484 = scalar_lea.sflag [#allocation4], %s483
        %s485 = sand.u32 %s252, 1
        %s486 = smul.addr %s485, 256
        %s487 = scalar_lea.vmem [#allocation11], %s486
        %p488 = pneg %p293
        %p489 = pneg %p290
        %s490 = sand.u32 %s34, 1
        %s491 = scalar_lea.sflag [#allocation13], %s490
        %s492 = sand.u32 %s280, 1
        %s493 = smul.addr %s492, 256
        %s494 = scalar_lea.vmem [#allocation12], %s493
        %p495 = pneg %p321
        %p496 = pneg %p318
        %s497 = sand.u32 %s34, 1
        %s498 = scalar_lea.sflag [#allocation13], %s497
        %s499 = sand.u32 %s308, 1
        %s500 = smul.addr %s499, 256
        %s501 = scalar_lea.vmem [#allocation14], %s500
        %s502 = smul.u32 16, %s39
        %s503 = smul.u32 16, %s39
        %s504 = smul.u32 16, %s39
        %s505 = smul.u32 16, %s39
        %v506 = vld [vmem:[%s437] sm:$0xff]
        %v507 = vld [vmem:[%s437 + $0x8] sm:$0xff]
        %v508 = vld [vmem:[%s437 + $0x10] sm:$0xff]
        %v509 = vld [vmem:[%s437 + $0x18] sm:$0xff]
        %v510 = vld [vmem:[%s437 + $0x20] sm:$0xff]
        %v511 = vld [vmem:[%s437 + $0x28] sm:$0xff]
        %v512 = vld [vmem:[%s437 + $0x30] sm:$0xff]
        %v513 = vld [vmem:[%s437 + $0x38] sm:$0xff]
        %v514 = vld [vmem:[%s437 + $0x40] sm:$0xff]
        %v515 = vld [vmem:[%s437 + $0x48] sm:$0xff]
        %v516 = vld [vmem:[%s437 + $0x50] sm:$0xff]
        %v517 = vld [vmem:[%s437 + $0x58] sm:$0xff]
        %v518 = vld [vmem:[%s437 + $0x60] sm:$0xff]
        %v519 = vld [vmem:[%s437 + $0x68] sm:$0xff]
        %v520 = vld [vmem:[%s437 + $0x70] sm:$0xff]
        %v521 = vld [vmem:[%s437 + $0x78] sm:$0xff]
        %v522 = vld [vmem:[%s437 + $0x80] sm:$0xff]
        %v523 = vld [vmem:[%s437 + $0x88] sm:$0xff]
        %v524 = vld [vmem:[%s437 + $0x90] sm:$0xff]
        %v525 = vld [vmem:[%s437 + $0x98] sm:$0xff]
        %v526 = vld [vmem:[%s437 + $0xa0] sm:$0xff]
        %v527 = vld [vmem:[%s437 + $0xa8] sm:$0xff]
        %v528 = vld [vmem:[%s437 + $0xb0] sm:$0xff]
        %v529 = vld [vmem:[%s437 + $0xb8] sm:$0xff]
        %v530 = vld [vmem:[%s437 + $0xc0] sm:$0xff]
        %v531 = vld [vmem:[%s437 + $0xc8] sm:$0xff]
        %v532 = vld [vmem:[%s437 + $0xd0] sm:$0xff]
        %v533 = vld [vmem:[%s437 + $0xd8] sm:$0xff]
        %v534 = vld [vmem:[%s437 + $0xe0] sm:$0xff]
        %v535 = vld [vmem:[%s437 + $0xe8] sm:$0xff]
        %v536 = vld [vmem:[%s437 + $0xf0] sm:$0xff]
        %v537 = vld [vmem:[%s437 + $0xf8] sm:$0xff]
        %v538 = vld [vmem:[#allocation5] sm:$0x3]
        %v539 = vld [vmem:[%s2] sm:$0x3]
        %v540 = vadd.f32 %v506, %v507
        %541 = vadd.xlane.f32.xlu0 %v540
        %v542 = vpop.xlane.xlu0 %541
        %v543 = vadd.f32 %v508, %v509
        %544 = vadd.xlane.f32.xlu0 %v543
        %v545 = vpop.xlane.xlu0 %544
        %v546 = vadd.f32 %v510, %v511
        %547 = vadd.xlane.f32.xlu0 %v546
        %v548 = vpop.xlane.xlu0 %547
        %v549 = vadd.f32 %v512, %v513
        %550 = vadd.xlane.f32.xlu0 %v549
        %v551 = vpop.xlane.xlu0 %550
        %v552 = vadd.f32 %v514, %v515
        %553 = vadd.xlane.f32.xlu0 %v552
        %v554 = vpop.xlane.xlu0 %553
        %v555 = vadd.f32 %v516, %v517
        %556 = vadd.xlane.f32.xlu0 %v555
        %v557 = vpop.xlane.xlu0 %556
        %v558 = vadd.f32 %v518, %v519
        %559 = vadd.xlane.f32.xlu0 %v558
        %v560 = vpop.xlane.xlu0 %559
        %v561 = vadd.f32 %v520, %v521
        %562 = vadd.xlane.f32.xlu0 %v561
        %v563 = vpop.xlane.xlu0 %562
        %v564 = vadd.f32 %v522, %v523
        %565 = vadd.xlane.f32.xlu0 %v564
        %v566 = vpop.xlane.xlu0 %565
        %v567 = vadd.f32 %v524, %v525
        %568 = vadd.xlane.f32.xlu0 %v567
        %v569 = vpop.xlane.xlu0 %568
        %v570 = vadd.f32 %v526, %v527
        %571 = vadd.xlane.f32.xlu0 %v570
        %v572 = vpop.xlane.xlu0 %571
        %v573 = vadd.f32 %v528, %v529
        %574 = vadd.xlane.f32.xlu0 %v573
        %v575 = vpop.xlane.xlu0 %574
        %v576 = vadd.f32 %v530, %v531
        %577 = vadd.xlane.f32.xlu0 %v576
        %v578 = vpop.xlane.xlu0 %577
        %v579 = vadd.f32 %v532, %v533
        %580 = vadd.xlane.f32.xlu0 %v579
        %v581 = vpop.xlane.xlu0 %580
        %v582 = vadd.f32 %v534, %v535
        %583 = vadd.xlane.f32.xlu0 %v582
        %v584 = vpop.xlane.xlu0 %583
        %v585 = vadd.f32 %v536, %v537
        %586 = vadd.xlane.f32.xlu0 %v585
        %v587 = vpop.xlane.xlu0 %586
        %v588 = vrcp.pop 256.0
        %v589 = vmul.f32 %v542, %v588
        %v590 = vmul.f32 %v545, %v588
        %v591 = vmul.f32 %v548, %v588
        %v592 = vmul.f32 %v551, %v588
        %v593 = vmul.f32 %v554, %v588
        %v594 = vmul.f32 %v557, %v588
        %v595 = vmul.f32 %v560, %v588
        %v596 = vmul.f32 %v563, %v588
        %v597 = vmul.f32 %v566, %v588
        %v598 = vmul.f32 %v569, %v588
        %v599 = vmul.f32 %v572, %v588
        %v600 = vmul.f32 %v575, %v588
        %v601 = vmul.f32 %v578, %v588
        %v602 = vmul.f32 %v581, %v588
        %v603 = vmul.f32 %v584, %v588
        %v604 = vmul.f32 %v587, %v588
        %v605 = vsub.f32 %v506, %v589
        %v606 = vsub.f32 %v507, %v589
        %v607 = vsub.f32 %v508, %v590
        %v608 = vsub.f32 %v509, %v590
        %v609 = vsub.f32 %v510, %v591
        %v610 = vsub.f32 %v511, %v591
        %v611 = vsub.f32 %v512, %v592
        %v612 = vsub.f32 %v513, %v592
        %v613 = vsub.f32 %v514, %v593
        %v614 = vsub.f32 %v515, %v593
        %v615 = vsub.f32 %v516, %v594
        %v616 = vsub.f32 %v517, %v594
        %v617 = vsub.f32 %v518, %v595
        %v618 = vsub.f32 %v519, %v595
        %v619 = vsub.f32 %v520, %v596
        %v620 = vsub.f32 %v521, %v596
        %v621 = vsub.f32 %v522, %v597
        %v622 = vsub.f32 %v523, %v597
        %v623 = vsub.f32 %v524, %v598
        %v624 = vsub.f32 %v525, %v598
        %v625 = vsub.f32 %v526, %v599
        %v626 = vsub.f32 %v527, %v599
        %v627 = vsub.f32 %v528, %v600
        %v628 = vsub.f32 %v529, %v600
        %v629 = vsub.f32 %v530, %v601
        %v630 = vsub.f32 %v531, %v601
        %v631 = vsub.f32 %v532, %v602
        %v632 = vsub.f32 %v533, %v602
        %v633 = vsub.f32 %v534, %v603
        %v634 = vsub.f32 %v535, %v603
        %v635 = vsub.f32 %v536, %v604
        %v636 = vsub.f32 %v537, %v604
        %v637 = vmul.f32 %v605, %v605
        %v638 = vmul.f32 %v606, %v606
        %v639 = vmul.f32 %v607, %v607
        %v640 = vmul.f32 %v608, %v608
        %v641 = vmul.f32 %v609, %v609
        %v642 = vmul.f32 %v610, %v610
        %v643 = vmul.f32 %v611, %v611
        %v644 = vmul.f32 %v612, %v612
        %v645 = vmul.f32 %v613, %v613
        %v646 = vmul.f32 %v614, %v614
        %v647 = vmul.f32 %v615, %v615
        %v648 = vmul.f32 %v616, %v616
        %v649 = vmul.f32 %v617, %v617
        %v650 = vmul.f32 %v618, %v618
        %v651 = vmul.f32 %v619, %v619
        %v652 = vmul.f32 %v620, %v620
        %v653 = vmul.f32 %v621, %v621
        %v654 = vmul.f32 %v622, %v622
        %v655 = vmul.f32 %v623, %v623
        %v656 = vmul.f32 %v624, %v624
        %v657 = vmul.f32 %v625, %v625
        %v658 = vmul.f32 %v626, %v626
        %v659 = vmul.f32 %v627, %v627
        %v660 = vmul.f32 %v628, %v628
        %v661 = vmul.f32 %v629, %v629
        %v662 = vmul.f32 %v630, %v630
        %v663 = vmul.f32 %v631, %v631
        %v664 = vmul.f32 %v632, %v632
        %v665 = vmul.f32 %v633, %v633
        %v666 = vmul.f32 %v634, %v634
        %v667 = vmul.f32 %v635, %v635
        %v668 = vmul.f32 %v636, %v636
        %v669 = vadd.f32 %v637, %v638
        %670 = vadd.xlane.f32.xlu0 %v669
        %v671 = vpop.xlane.xlu0 %670
        %v672 = vadd.f32 %v639, %v640
        %673 = vadd.xlane.f32.xlu0 %v672
        %v674 = vpop.xlane.xlu0 %673
        %v675 = vadd.f32 %v641, %v642
        %676 = vadd.xlane.f32.xlu0 %v675
        %v677 = vpop.xlane.xlu0 %676
        %v678 = vadd.f32 %v643, %v644
        %679 = vadd.xlane.f32.xlu0 %v678
        %v680 = vpop.xlane.xlu0 %679
        %v681 = vadd.f32 %v645, %v646
        %682 = vadd.xlane.f32.xlu0 %v681
        %v683 = vpop.xlane.xlu0 %682
        %v684 = vadd.f32 %v647, %v648
        %685 = vadd.xlane.f32.xlu0 %v684
        %v686 = vpop.xlane.xlu0 %685
        %v687 = vadd.f32 %v649, %v650
        %688 = vadd.xlane.f32.xlu0 %v687
        %v689 = vpop.xlane.xlu0 %688
        %v690 = vadd.f32 %v651, %v652
        %691 = vadd.xlane.f32.xlu0 %v690
        %v692 = vpop.xlane.xlu0 %691
        %v693 = vadd.f32 %v653, %v654
        %694 = vadd.xlane.f32.xlu0 %v693
        %v695 = vpop.xlane.xlu0 %694
        %v696 = vadd.f32 %v655, %v656
        %697 = vadd.xlane.f32.xlu0 %v696
        %v698 = vpop.xlane.xlu0 %697
        %v699 = vadd.f32 %v657, %v658
        %700 = vadd.xlane.f32.xlu0 %v699
        %v701 = vpop.xlane.xlu0 %700
        %v702 = vadd.f32 %v659, %v660
        %703 = vadd.xlane.f32.xlu0 %v702
        %v704 = vpop.xlane.xlu0 %703
        %v705 = vadd.f32 %v661, %v662
        %706 = vadd.xlane.f32.xlu0 %v705
        %v707 = vpop.xlane.xlu0 %706
        %v708 = vadd.f32 %v663, %v664
        %709 = vadd.xlane.f32.xlu0 %v708
        %v710 = vpop.xlane.xlu0 %709
        %v711 = vadd.f32 %v665, %v666
        %712 = vadd.xlane.f32.xlu0 %v711
        %v713 = vpop.xlane.xlu0 %712
        %v714 = vadd.f32 %v667, %v668
        %715 = vadd.xlane.f32.xlu0 %v714
        %v716 = vpop.xlane.xlu0 %715
        %v717 = vmul.f32 %v671, %v588
        %v718 = vmul.f32 %v674, %v588
        %v719 = vmul.f32 %v677, %v588
        %v720 = vmul.f32 %v680, %v588
        %v721 = vmul.f32 %v683, %v588
        %v722 = vmul.f32 %v686, %v588
        %v723 = vmul.f32 %v689, %v588
        %v724 = vmul.f32 %v692, %v588
        %v725 = vmul.f32 %v695, %v588
        %v726 = vmul.f32 %v698, %v588
        %v727 = vmul.f32 %v701, %v588
        %v728 = vmul.f32 %v704, %v588
        %v729 = vmul.f32 %v707, %v588
        %v730 = vmul.f32 %v710, %v588
        %v731 = vmul.f32 %v713, %v588
        %v732 = vmul.f32 %v716, %v588
        %v733 = vadd.f32 %v717, 1e-05
        %v734 = vadd.f32 %v718, 1e-05
        %v735 = vadd.f32 %v719, 1e-05
        %v736 = vadd.f32 %v720, 1e-05
        %v737 = vadd.f32 %v721, 1e-05
        %v738 = vadd.f32 %v722, 1e-05
        %v739 = vadd.f32 %v723, 1e-05
        %v740 = vadd.f32 %v724, 1e-05
        %v741 = vadd.f32 %v725, 1e-05
        %v742 = vadd.f32 %v726, 1e-05
        %v743 = vadd.f32 %v727, 1e-05
        %v744 = vadd.f32 %v728, 1e-05
        %v745 = vadd.f32 %v729, 1e-05
        %v746 = vadd.f32 %v730, 1e-05
        %v747 = vadd.f32 %v731, 1e-05
        %v748 = vadd.f32 %v732, 1e-05
        %v749 = vrsqrt.pop %v733
        %v750 = vrsqrt.pop %v734
        %v751 = vrsqrt.pop %v735
        %v752 = vrsqrt.pop %v736
        %v753 = vrsqrt.pop %v737
        %v754 = vrsqrt.pop %v738
        %v755 = vrsqrt.pop %v739
        %v756 = vrsqrt.pop %v740
        %v757 = vrsqrt.pop %v741
        %v758 = vrsqrt.pop %v742
        %v759 = vrsqrt.pop %v743
        %v760 = vrsqrt.pop %v744
        %v761 = vrsqrt.pop %v745
        %v762 = vrsqrt.pop %v746
        %v763 = vrsqrt.pop %v747
        %v764 = vrsqrt.pop %v748
        %v765 = vmul.f32 %v605, %v749
        %v766 = vmul.f32 %v606, %v749
        %v767 = vmul.f32 %v607, %v750
        %v768 = vmul.f32 %v608, %v750
        %v769 = vmul.f32 %v609, %v751
        %v770 = vmul.f32 %v610, %v751
        %v771 = vmul.f32 %v611, %v752
        %v772 = vmul.f32 %v612, %v752
        %v773 = vmul.f32 %v613, %v753
        %v774 = vmul.f32 %v614, %v753
        %v775 = vmul.f32 %v615, %v754
        %v776 = vmul.f32 %v616, %v754
        %v777 = vmul.f32 %v617, %v755
        %v778 = vmul.f32 %v618, %v755
        %v779 = vmul.f32 %v619, %v756
        %v780 = vmul.f32 %v620, %v756
        %v781 = vmul.f32 %v621, %v757
        %v782 = vmul.f32 %v622, %v757
        %v783 = vmul.f32 %v623, %v758
        %v784 = vmul.f32 %v624, %v758
        %v785 = vmul.f32 %v625, %v759
        %v786 = vmul.f32 %v626, %v759
        %v787 = vmul.f32 %v627, %v760
        %v788 = vmul.f32 %v628, %v760
        %v789 = vmul.f32 %v629, %v761
        %v790 = vmul.f32 %v630, %v761
        %v791 = vmul.f32 %v631, %v762
        %v792 = vmul.f32 %v632, %v762
        %v793 = vmul.f32 %v633, %v763
        %v794 = vmul.f32 %v634, %v763
        %v795 = vmul.f32 %v635, %v764
        %v796 = vmul.f32 %v636, %v764
        %v798 = vlaneseq
        %v799 = vshrl.u32 %v798, 7
        %v800 = vsub.s32 0, %v799
        %v801 = vrot.slane %v538, %v800
        %v802 = vlaneseq
        %v803 = vshrl.u32 %v802, 7
        %v804 = vsub.s32 1, %v803
        %v805 = vrot.slane %v538, %v804
        %v808 = vmul.f32 %v765, %v801
        %v809 = vmul.f32 %v766, %v805
        %v810 = vmul.f32 %v767, %v801
        %v811 = vmul.f32 %v768, %v805
        %v812 = vmul.f32 %v769, %v801
        %v813 = vmul.f32 %v770, %v805
        %v814 = vmul.f32 %v771, %v801
        %v815 = vmul.f32 %v772, %v805
        %v816 = vmul.f32 %v773, %v801
        %v817 = vmul.f32 %v774, %v805
        %v818 = vmul.f32 %v775, %v801
        %v819 = vmul.f32 %v776, %v805
        %v820 = vmul.f32 %v777, %v801
        %v821 = vmul.f32 %v778, %v805
        %v822 = vmul.f32 %v779, %v801
        %v823 = vmul.f32 %v780, %v805
        %v824 = vmul.f32 %v781, %v801
        %v825 = vmul.f32 %v782, %v805
        %v826 = vmul.f32 %v783, %v801
        %v827 = vmul.f32 %v784, %v805
        %v828 = vmul.f32 %v785, %v801
        %v829 = vmul.f32 %v786, %v805
        %v830 = vmul.f32 %v787, %v801
        %v831 = vmul.f32 %v788, %v805
        %v832 = vmul.f32 %v789, %v801
        %v833 = vmul.f32 %v790, %v805
        %v834 = vmul.f32 %v791, %v801
        %v835 = vmul.f32 %v792, %v805
        %v836 = vmul.f32 %v793, %v801
        %v837 = vmul.f32 %v794, %v805
        %v838 = vmul.f32 %v795, %v801
        %v839 = vmul.f32 %v796, %v805
        %v841 = vlaneseq
        %v842 = vshrl.u32 %v841, 7
        %v843 = vsub.s32 0, %v842
        %v844 = vrot.slane %v539, %v843
        %v845 = vlaneseq
        %v846 = vshrl.u32 %v845, 7
        %v847 = vsub.s32 1, %v846
        %v848 = vrot.slane %v539, %v847
        %v851 = vadd.f32 %v808, %v844
        %v852 = vadd.f32 %v809, %v848
        %v853 = vadd.f32 %v810, %v844
        %v854 = vadd.f32 %v811, %v848
        %v855 = vadd.f32 %v812, %v844
        %v856 = vadd.f32 %v813, %v848
        %v857 = vadd.f32 %v814, %v844
        %v858 = vadd.f32 %v815, %v848
        %v859 = vadd.f32 %v816, %v844
        %v860 = vadd.f32 %v817, %v848
        %v861 = vadd.f32 %v818, %v844
        %v862 = vadd.f32 %v819, %v848
        %v863 = vadd.f32 %v820, %v844
        %v864 = vadd.f32 %v821, %v848
        %v865 = vadd.f32 %v822, %v844
        %v866 = vadd.f32 %v823, %v848
        %v867 = vadd.f32 %v824, %v844
        %v868 = vadd.f32 %v825, %v848
        %v869 = vadd.f32 %v826, %v844
        %v870 = vadd.f32 %v827, %v848
        %v871 = vadd.f32 %v828, %v844
        %v872 = vadd.f32 %v829, %v848
        %v873 = vadd.f32 %v830, %v844
        %v874 = vadd.f32 %v831, %v848
        %v875 = vadd.f32 %v832, %v844
        %v876 = vadd.f32 %v833, %v848
        %v877 = vadd.f32 %v834, %v844
        %v878 = vadd.f32 %v835, %v848
        %v879 = vadd.f32 %v836, %v844
        %v880 = vadd.f32 %v837, %v848
        %v881 = vadd.f32 %v838, %v844
        %v882 = vadd.f32 %v839, %v848
        %v883 = vld [vmem:[#allocation7] sm:$0xff]
        %v884 = vld [vmem:[#allocation7 + $0x8] sm:$0xff]
        %v885 = vld [vmem:[#allocation7 + $0x10] sm:$0xff]
        %v886 = vld [vmem:[#allocation7 + $0x18] sm:$0xff]
        %v887 = vld [vmem:[#allocation7 + $0x20] sm:$0xff]
        %v888 = vld [vmem:[#allocation7 + $0x28] sm:$0xff]
        %v889 = vld [vmem:[#allocation7 + $0x30] sm:$0xff]
        %v890 = vld [vmem:[#allocation7 + $0x38] sm:$0xff]
        %v891 = vld [vmem:[#allocation7 + $0x40] sm:$0xff]
        %v892 = vld [vmem:[#allocation7 + $0x48] sm:$0xff]
        %v893 = vld [vmem:[#allocation7 + $0x50] sm:$0xff]
        %v894 = vld [vmem:[#allocation7 + $0x58] sm:$0xff]
        %v895 = vld [vmem:[#allocation7 + $0x60] sm:$0xff]
        %v896 = vld [vmem:[#allocation7 + $0x68] sm:$0xff]
        %v897 = vld [vmem:[#allocation7 + $0x70] sm:$0xff]
        %v898 = vld [vmem:[#allocation7 + $0x78] sm:$0xff]
        %v899 = vld [vmem:[#allocation7 + $0x80] sm:$0xff]
        %v900 = vld [vmem:[#allocation7 + $0x88] sm:$0xff]
        %v901 = vld [vmem:[#allocation7 + $0x90] sm:$0xff]
        %v902 = vld [vmem:[#allocation7 + $0x98] sm:$0xff]
        %v903 = vld [vmem:[#allocation7 + $0xa0] sm:$0xff]
        %v904 = vld [vmem:[#allocation7 + $0xa8] sm:$0xff]
        %v905 = vld [vmem:[#allocation7 + $0xb0] sm:$0xff]
        %v906 = vld [vmem:[#allocation7 + $0xb8] sm:$0xff]
        %v907 = vld [vmem:[#allocation7 + $0xc0] sm:$0xff]
        %v908 = vld [vmem:[#allocation7 + $0xc8] sm:$0xff]
        %v909 = vld [vmem:[#allocation7 + $0xd0] sm:$0xff]
        %v910 = vld [vmem:[#allocation7 + $0xd8] sm:$0xff]
        %v911 = vld [vmem:[#allocation7 + $0xe0] sm:$0xff]
        %v912 = vld [vmem:[#allocation7 + $0xe8] sm:$0xff]
        %v913 = vld [vmem:[#allocation7 + $0xf0] sm:$0xff]
        %v914 = vld [vmem:[#allocation7 + $0xf8] sm:$0xff]
        %v915 = vld [vmem:[#allocation7 + $0x100] sm:$0xff]
        %v916 = vld [vmem:[#allocation7 + $0x108] sm:$0xff]
        %v917 = vld [vmem:[#allocation7 + $0x110] sm:$0xff]
        %v918 = vld [vmem:[#allocation7 + $0x118] sm:$0xff]
        %v919 = vld [vmem:[#allocation7 + $0x120] sm:$0xff]
        %v920 = vld [vmem:[#allocation7 + $0x128] sm:$0xff]
        %v921 = vld [vmem:[#allocation7 + $0x130] sm:$0xff]
        %v922 = vld [vmem:[#allocation7 + $0x138] sm:$0xff]
        %v923 = vld [vmem:[#allocation7 + $0x140] sm:$0xff]
        %v924 = vld [vmem:[#allocation7 + $0x148] sm:$0xff]
        %v925 = vld [vmem:[#allocation7 + $0x150] sm:$0xff]
        %v926 = vld [vmem:[#allocation7 + $0x158] sm:$0xff]
        %v927 = vld [vmem:[#allocation7 + $0x160] sm:$0xff]
        %v928 = vld [vmem:[#allocation7 + $0x168] sm:$0xff]
        %v929 = vld [vmem:[#allocation7 + $0x170] sm:$0xff]
        %v930 = vld [vmem:[#allocation7 + $0x178] sm:$0xff]
        %v931 = vld [vmem:[#allocation7 + $0x180] sm:$0xff]
        %v932 = vld [vmem:[#allocation7 + $0x188] sm:$0xff]
        %v933 = vld [vmem:[#allocation7 + $0x190] sm:$0xff]
        %v934 = vld [vmem:[#allocation7 + $0x198] sm:$0xff]
        %v935 = vld [vmem:[#allocation7 + $0x1a0] sm:$0xff]
        %v936 = vld [vmem:[#allocation7 + $0x1a8] sm:$0xff]
        %v937 = vld [vmem:[#allocation7 + $0x1b0] sm:$0xff]
        %v938 = vld [vmem:[#allocation7 + $0x1b8] sm:$0xff]
        %v939 = vld [vmem:[#allocation7 + $0x1c0] sm:$0xff]
        %v940 = vld [vmem:[#allocation7 + $0x1c8] sm:$0xff]
        %v941 = vld [vmem:[#allocation7 + $0x1d0] sm:$0xff]
        %v942 = vld [vmem:[#allocation7 + $0x1d8] sm:$0xff]
        %v943 = vld [vmem:[#allocation7 + $0x1e0] sm:$0xff]
        %v944 = vld [vmem:[#allocation7 + $0x1e8] sm:$0xff]
        %v945 = vld [vmem:[#allocation7 + $0x1f0] sm:$0xff]
        %v946 = vld [vmem:[#allocation7 + $0x1f8] sm:$0xff]
        %v947 = vld [vmem:[%s4] sm:$0x3]
        %v949 = vlaneseq
        %v950 = vshrl.u32 %v949, 7
        %v951 = vsub.s32 0, %v950
        %v952 = vrot.slane %v947, %v951
        %v953 = vlaneseq
        %v954 = vshrl.u32 %v953, 7
        %v955 = vsub.s32 1, %v954
        %v956 = vrot.slane %v947, %v955
        %959 = vmatprep.subr.mxu0 %v914
        %960 = vmatpush1.msra.mxu0 %v913
        %961 = vmatprep.subr.mxu0 %v912
        %962 = vmatpush1.msra.mxu0 %v911
        %963 = vmatprep.subr.mxu0 %v910
        %964 = vmatpush1.msra.mxu0 %v909
        %965 = vmatprep.subr.mxu0 %v908
        %966 = vmatpush1.msra.mxu0 %v907
        %967 = vmatprep.subr.mxu0 %v906
        %968 = vmatpush1.msra.mxu0 %v905
        %969 = vmatprep.subr.mxu0 %v904
        %970 = vmatpush1.msra.mxu0 %v903
        %971 = vmatprep.subr.mxu0 %v902
        %972 = vmatpush1.msra.mxu0 %v901
        %973 = vmatprep.subr.mxu0 %v900
        %974 = vmatpush1.msra.mxu0 %v899
        %975 = vmatprep.subr.mxu0 %v898
        %976 = vmatpush1.msra.mxu0 %v897
        %977 = vmatprep.subr.mxu0 %v896
        %978 = vmatpush1.msra.mxu0 %v895
        %979 = vmatprep.subr.mxu0 %v894
        %980 = vmatpush1.msra.mxu0 %v893
        %981 = vmatprep.subr.mxu0 %v892
        %982 = vmatpush1.msra.mxu0 %v891
        %983 = vmatprep.subr.mxu0 %v890
        %984 = vmatpush1.msra.mxu0 %v889
        %985 = vmatprep.subr.mxu0 %v888
        %986 = vmatpush1.msra.mxu0 %v887
        %987 = vmatprep.subr.mxu0 %v886
        %988 = vmatpush1.msra.mxu0 %v885
        %989 = vmatprep.subr.mxu0 %v884
        %990 = vmatpush1.msra.mxu0 %v883
        %991 = vmatprep.subr.mxu0 %v946
        %992 = vmatpush2.msra.mxu0 %v945
        %993 = vmatprep.subr.mxu0 %v944
        %994 = vmatpush2.msra.mxu0 %v943
        %995 = vmatprep.subr.mxu0 %v942
        %996 = vmatpush2.msra.mxu0 %v941
        %997 = vmatprep.subr.mxu0 %v940
        %998 = vmatpush2.msra.mxu0 %v939
        %999 = vmatprep.subr.mxu0 %v938
        %1000 = vmatpush2.msra.mxu0 %v937
        %1001 = vmatprep.subr.mxu0 %v936
        %1002 = vmatpush2.msra.mxu0 %v935
        %1003 = vmatprep.subr.mxu0 %v934
        %1004 = vmatpush2.msra.mxu0 %v933
        %1005 = vmatprep.subr.mxu0 %v932
        %1006 = vmatpush2.msra.mxu0 %v931
        %1007 = vmatprep.subr.mxu0 %v930
        %1008 = vmatpush2.msra.mxu0 %v929
        %1009 = vmatprep.subr.mxu0 %v928
        %1010 = vmatpush2.msra.mxu0 %v927
        %1011 = vmatprep.subr.mxu0 %v926
        %1012 = vmatpush2.msra.mxu0 %v925
        %1013 = vmatprep.subr.mxu0 %v924
        %1014 = vmatpush2.msra.mxu0 %v923
        %1015 = vmatprep.subr.mxu0 %v922
        %1016 = vmatpush2.msra.mxu0 %v921
        %1017 = vmatprep.subr.mxu0 %v920
        %1018 = vmatpush2.msra.mxu0 %v919
        %1019 = vmatprep.subr.mxu0 %v918
        %1020 = vmatpush2.msra.mxu0 %v917
        %1021 = vmatprep.subr.mxu0 %v916
        %1022 = vmatpush2.msra.mxu0 %v915
        %1023 = vmatprep.mubr.f32.mxu0 %v852
        %1024 = vmatmul.mubr.f32.gmra.mxu0 %v851
        %v1025 = vpop.f32.mrf.mxu0
        %v1026 = vadd.f32 %v952, %v1025
        %v1027 = vpop.f32.mrf.mxu0
        %v1028 = vadd.f32 %v956, %v1027
        %1029 = vmatprep.mubr.f32.mxu0 %v854
        %1030 = vmatmul.mubr.f32.gmra.mxu0 %v853
        %v1031 = vpop.f32.mrf.mxu0
        %v1032 = vadd.f32 %v952, %v1031
        %v1033 = vpop.f32.mrf.mxu0
        %v1034 = vadd.f32 %v956, %v1033
        %1035 = vmatprep.mubr.f32.mxu0 %v856
        %1036 = vmatmul.mubr.f32.gmra.mxu0 %v855
        %v1037 = vpop.f32.mrf.mxu0
        %v1038 = vadd.f32 %v952, %v1037
        %v1039 = vpop.f32.mrf.mxu0
        %v1040 = vadd.f32 %v956, %v1039
        %1041 = vmatprep.mubr.f32.mxu0 %v858
        %1042 = vmatmul.mubr.f32.gmra.mxu0 %v857
        %v1043 = vpop.f32.mrf.mxu0
        %v1044 = vadd.f32 %v952, %v1043
        %v1045 = vpop.f32.mrf.mxu0
        %v1046 = vadd.f32 %v956, %v1045
        %1047 = vmatprep.mubr.f32.mxu0 %v860
        %1048 = vmatmul.mubr.f32.gmra.mxu0 %v859
        %v1049 = vpop.f32.mrf.mxu0
        %v1050 = vadd.f32 %v952, %v1049
        %v1051 = vpop.f32.mrf.mxu0
        %v1052 = vadd.f32 %v956, %v1051
        %1053 = vmatprep.mubr.f32.mxu0 %v862
        %1054 = vmatmul.mubr.f32.gmra.mxu0 %v861
        %v1055 = vpop.f32.mrf.mxu0
        %v1056 = vadd.f32 %v952, %v1055
        %v1057 = vpop.f32.mrf.mxu0
        %v1058 = vadd.f32 %v956, %v1057
        %1059 = vmatprep.mubr.f32.mxu0 %v864
        %1060 = vmatmul.mubr.f32.gmra.mxu0 %v863
        %v1061 = vpop.f32.mrf.mxu0
        %v1062 = vadd.f32 %v952, %v1061
        %v1063 = vpop.f32.mrf.mxu0
        %v1064 = vadd.f32 %v956, %v1063
        %1065 = vmatprep.mubr.f32.mxu0 %v866
        %1066 = vmatmul.mubr.f32.gmra.mxu0 %v865
        %v1067 = vpop.f32.mrf.mxu0
        %v1068 = vadd.f32 %v952, %v1067
        %v1069 = vpop.f32.mrf.mxu0
        %v1070 = vadd.f32 %v956, %v1069
        %1071 = vmatprep.mubr.f32.mxu0 %v868
        %1072 = vmatmul.mubr.f32.gmra.mxu0 %v867
        %v1073 = vpop.f32.mrf.mxu0
        %v1074 = vadd.f32 %v952, %v1073
        %v1075 = vpop.f32.mrf.mxu0
        %v1076 = vadd.f32 %v956, %v1075
        %1077 = vmatprep.mubr.f32.mxu0 %v870
        %1078 = vmatmul.mubr.f32.gmra.mxu0 %v869
        %v1079 = vpop.f32.mrf.mxu0
        %v1080 = vadd.f32 %v952, %v1079
        %v1081 = vpop.f32.mrf.mxu0
        %v1082 = vadd.f32 %v956, %v1081
        %1083 = vmatprep.mubr.f32.mxu0 %v872
        %1084 = vmatmul.mubr.f32.gmra.mxu0 %v871
        %v1085 = vpop.f32.mrf.mxu0
        %v1086 = vadd.f32 %v952, %v1085
        %v1087 = vpop.f32.mrf.mxu0
        %v1088 = vadd.f32 %v956, %v1087
        %1089 = vmatprep.mubr.f32.mxu0 %v874
        %1090 = vmatmul.mubr.f32.gmra.mxu0 %v873
        %v1091 = vpop.f32.mrf.mxu0
        %v1092 = vadd.f32 %v952, %v1091
        %v1093 = vpop.f32.mrf.mxu0
        %v1094 = vadd.f32 %v956, %v1093
        %1095 = vmatprep.mubr.f32.mxu0 %v876
        %1096 = vmatmul.mubr.f32.gmra.mxu0 %v875
        %v1097 = vpop.f32.mrf.mxu0
        %v1098 = vadd.f32 %v952, %v1097
        %v1099 = vpop.f32.mrf.mxu0
        %v1100 = vadd.f32 %v956, %v1099
        %1101 = vmatprep.mubr.f32.mxu0 %v878
        %1102 = vmatmul.mubr.f32.gmra.mxu0 %v877
        %v1103 = vpop.f32.mrf.mxu0
        %v1104 = vadd.f32 %v952, %v1103
        %v1105 = vpop.f32.mrf.mxu0
        %v1106 = vadd.f32 %v956, %v1105
        %1107 = vmatprep.mubr.f32.mxu0 %v880
        %1108 = vmatmul.mubr.f32.gmra.mxu0 %v879
        %v1109 = vpop.f32.mrf.mxu0
        %v1110 = vadd.f32 %v952, %v1109
        %v1111 = vpop.f32.mrf.mxu0
        %v1112 = vadd.f32 %v956, %v1111
        %1113 = vmatprep.mubr.f32.mxu0 %v882
        %1114 = vmatmul.mubr.f32.gmra.mxu0 %v881
        %v1115 = vpop.f32.mrf.mxu0
        %v1116 = vadd.f32 %v952, %v1115
        %v1117 = vpop.f32.mrf.mxu0
        %v1118 = vadd.f32 %v956, %v1117
        %1119 = vdwg.mxu0
        %v1120 = vmul.f32 %v1026, 0.088388346
        %v1121 = vmul.f32 %v1028, 0.088388346
        %v1122 = vmul.f32 %v1032, 0.088388346
        %v1123 = vmul.f32 %v1034, 0.088388346
        %v1124 = vmul.f32 %v1038, 0.088388346
        %v1125 = vmul.f32 %v1040, 0.088388346
        %v1126 = vmul.f32 %v1044, 0.088388346
        %v1127 = vmul.f32 %v1046, 0.088388346
        %v1128 = vmul.f32 %v1050, 0.088388346
        %v1129 = vmul.f32 %v1052, 0.088388346
        %v1130 = vmul.f32 %v1056, 0.088388346
        %v1131 = vmul.f32 %v1058, 0.088388346
        %v1132 = vmul.f32 %v1062, 0.088388346
        %v1133 = vmul.f32 %v1064, 0.088388346
        %v1134 = vmul.f32 %v1068, 0.088388346
        %v1135 = vmul.f32 %v1070, 0.088388346
        %v1136 = vmul.f32 %v1074, 0.088388346
        %v1137 = vmul.f32 %v1076, 0.088388346
        %v1138 = vmul.f32 %v1080, 0.088388346
        %v1139 = vmul.f32 %v1082, 0.088388346
        %v1140 = vmul.f32 %v1086, 0.088388346
        %v1141 = vmul.f32 %v1088, 0.088388346
        %v1142 = vmul.f32 %v1092, 0.088388346
        %v1143 = vmul.f32 %v1094, 0.088388346
        %v1144 = vmul.f32 %v1098, 0.088388346
        %v1145 = vmul.f32 %v1100, 0.088388346
        %v1146 = vmul.f32 %v1104, 0.088388346
        %v1147 = vmul.f32 %v1106, 0.088388346
        %v1148 = vmul.f32 %v1110, 0.088388346
        %v1149 = vmul.f32 %v1112, 0.088388346
        %v1150 = vmul.f32 %v1116, 0.088388346
        %v1151 = vmul.f32 %v1118, 0.088388346
        %v1152 = vld [vmem:[#allocation8] sm:$0xff]
        %v1153 = vld [vmem:[#allocation8 + $0x8] sm:$0xff]
        %v1154 = vld [vmem:[#allocation8 + $0x10] sm:$0xff]
        %v1155 = vld [vmem:[#allocation8 + $0x18] sm:$0xff]
        %v1156 = vld [vmem:[#allocation8 + $0x20] sm:$0xff]
        %v1157 = vld [vmem:[#allocation8 + $0x28] sm:$0xff]
        %v1158 = vld [vmem:[#allocation8 + $0x30] sm:$0xff]
        %v1159 = vld [vmem:[#allocation8 + $0x38] sm:$0xff]
        %v1160 = vld [vmem:[#allocation8 + $0x40] sm:$0xff]
        %v1161 = vld [vmem:[#allocation8 + $0x48] sm:$0xff]
        %v1162 = vld [vmem:[#allocation8 + $0x50] sm:$0xff]
        %v1163 = vld [vmem:[#allocation8 + $0x58] sm:$0xff]
        %v1164 = vld [vmem:[#allocation8 + $0x60] sm:$0xff]
        %v1165 = vld [vmem:[#allocation8 + $0x68] sm:$0xff]
        %v1166 = vld [vmem:[#allocation8 + $0x70] sm:$0xff]
        %v1167 = vld [vmem:[#allocation8 + $0x78] sm:$0xff]
        %v1168 = vld [vmem:[#allocation8 + $0x80] sm:$0xff]
        %v1169 = vld [vmem:[#allocation8 + $0x88] sm:$0xff]
        %v1170 = vld [vmem:[#allocation8 + $0x90] sm:$0xff]
        %v1171 = vld [vmem:[#allocation8 + $0x98] sm:$0xff]
        %v1172 = vld [vmem:[#allocation8 + $0xa0] sm:$0xff]
        %v1173 = vld [vmem:[#allocation8 + $0xa8] sm:$0xff]
        %v1174 = vld [vmem:[#allocation8 + $0xb0] sm:$0xff]
        %v1175 = vld [vmem:[#allocation8 + $0xb8] sm:$0xff]
        %v1176 = vld [vmem:[#allocation8 + $0xc0] sm:$0xff]
        %v1177 = vld [vmem:[#allocation8 + $0xc8] sm:$0xff]
        %v1178 = vld [vmem:[#allocation8 + $0xd0] sm:$0xff]
        %v1179 = vld [vmem:[#allocation8 + $0xd8] sm:$0xff]
        %v1180 = vld [vmem:[#allocation8 + $0xe0] sm:$0xff]
        %v1181 = vld [vmem:[#allocation8 + $0xe8] sm:$0xff]
        %v1182 = vld [vmem:[#allocation8 + $0xf0] sm:$0xff]
        %v1183 = vld [vmem:[#allocation8 + $0xf8] sm:$0xff]
        %v1184 = vld [vmem:[#allocation8 + $0x100] sm:$0xff]
        %v1185 = vld [vmem:[#allocation8 + $0x108] sm:$0xff]
        %v1186 = vld [vmem:[#allocation8 + $0x110] sm:$0xff]
        %v1187 = vld [vmem:[#allocation8 + $0x118] sm:$0xff]
        %v1188 = vld [vmem:[#allocation8 + $0x120] sm:$0xff]
        %v1189 = vld [vmem:[#allocation8 + $0x128] sm:$0xff]
        %v1190 = vld [vmem:[#allocation8 + $0x130] sm:$0xff]
        %v1191 = vld [vmem:[#allocation8 + $0x138] sm:$0xff]
        %v1192 = vld [vmem:[#allocation8 + $0x140] sm:$0xff]
        %v1193 = vld [vmem:[#allocation8 + $0x148] sm:$0xff]
        %v1194 = vld [vmem:[#allocation8 + $0x150] sm:$0xff]
        %v1195 = vld [vmem:[#allocation8 + $0x158] sm:$0xff]
        %v1196 = vld [vmem:[#allocation8 + $0x160] sm:$0xff]
        %v1197 = vld [vmem:[#allocation8 + $0x168] sm:$0xff]
        %v1198 = vld [vmem:[#allocation8 + $0x170] sm:$0xff]
        %v1199 = vld [vmem:[#allocation8 + $0x178] sm:$0xff]
        %v1200 = vld [vmem:[#allocation8 + $0x180] sm:$0xff]
        %v1201 = vld [vmem:[#allocation8 + $0x188] sm:$0xff]
        %v1202 = vld [vmem:[#allocation8 + $0x190] sm:$0xff]
        %v1203 = vld [vmem:[#allocation8 + $0x198] sm:$0xff]
        %v1204 = vld [vmem:[#allocation8 + $0x1a0] sm:$0xff]
        %v1205 = vld [vmem:[#allocation8 + $0x1a8] sm:$0xff]
        %v1206 = vld [vmem:[#allocation8 + $0x1b0] sm:$0xff]
        %v1207 = vld [vmem:[#allocation8 + $0x1b8] sm:$0xff]
        %v1208 = vld [vmem:[#allocation8 + $0x1c0] sm:$0xff]
        %v1209 = vld [vmem:[#allocation8 + $0x1c8] sm:$0xff]
        %v1210 = vld [vmem:[#allocation8 + $0x1d0] sm:$0xff]
        %v1211 = vld [vmem:[#allocation8 + $0x1d8] sm:$0xff]
        %v1212 = vld [vmem:[#allocation8 + $0x1e0] sm:$0xff]
        %v1213 = vld [vmem:[#allocation8 + $0x1e8] sm:$0xff]
        %v1214 = vld [vmem:[#allocation8 + $0x1f0] sm:$0xff]
        %v1215 = vld [vmem:[#allocation8 + $0x1f8] sm:$0xff]
        %v1216 = vld [vmem:[%s6] sm:$0x3]
        %v1218 = vlaneseq
        %v1219 = vshrl.u32 %v1218, 7
        %v1220 = vsub.s32 0, %v1219
        %v1221 = vrot.slane %v1216, %v1220
        %v1222 = vlaneseq
        %v1223 = vshrl.u32 %v1222, 7
        %v1224 = vsub.s32 1, %v1223
        %v1225 = vrot.slane %v1216, %v1224
        %1228 = vmatprep.subr.mxu0 %v1183
        %1229 = vmatpush1.msra.mxu0 %v1182
        %1230 = vmatprep.subr.mxu0 %v1181
        %1231 = vmatpush1.msra.mxu0 %v1180
        %1232 = vmatprep.subr.mxu0 %v1179
        %1233 = vmatpush1.msra.mxu0 %v1178
        %1234 = vmatprep.subr.mxu0 %v1177
        %1235 = vmatpush1.msra.mxu0 %v1176
        %1236 = vmatprep.subr.mxu0 %v1175
        %1237 = vmatpush1.msra.mxu0 %v1174
        %1238 = vmatprep.subr.mxu0 %v1173
        %1239 = vmatpush1.msra.mxu0 %v1172
        %1240 = vmatprep.subr.mxu0 %v1171
        %1241 = vmatpush1.msra.mxu0 %v1170
        %1242 = vmatprep.subr.mxu0 %v1169
        %1243 = vmatpush1.msra.mxu0 %v1168
        %1244 = vmatprep.subr.mxu0 %v1167
        %1245 = vmatpush1.msra.mxu0 %v1166
        %1246 = vmatprep.subr.mxu0 %v1165
        %1247 = vmatpush1.msra.mxu0 %v1164
        %1248 = vmatprep.subr.mxu0 %v1163
        %1249 = vmatpush1.msra.mxu0 %v1162
        %1250 = vmatprep.subr.mxu0 %v1161
        %1251 = vmatpush1.msra.mxu0 %v1160
        %1252 = vmatprep.subr.mxu0 %v1159
        %1253 = vmatpush1.msra.mxu0 %v1158
        %1254 = vmatprep.subr.mxu0 %v1157
        %1255 = vmatpush1.msra.mxu0 %v1156
        %1256 = vmatprep.subr.mxu0 %v1155
        %1257 = vmatpush1.msra.mxu0 %v1154
        %1258 = vmatprep.subr.mxu0 %v1153
        %1259 = vmatpush1.msra.mxu0 %v1152
        %1260 = vmatprep.subr.mxu0 %v1215
        %1261 = vmatpush2.msra.mxu0 %v1214
        %1262 = vmatprep.subr.mxu0 %v1213
        %1263 = vmatpush2.msra.mxu0 %v1212
        %1264 = vmatprep.subr.mxu0 %v1211
        %1265 = vmatpush2.msra.mxu0 %v1210
        %1266 = vmatprep.subr.mxu0 %v1209
        %1267 = vmatpush2.msra.mxu0 %v1208
        %1268 = vmatprep.subr.mxu0 %v1207
        %1269 = vmatpush2.msra.mxu0 %v1206
        %1270 = vmatprep.subr.mxu0 %v1205
        %1271 = vmatpush2.msra.mxu0 %v1204
        %1272 = vmatprep.subr.mxu0 %v1203
        %1273 = vmatpush2.msra.mxu0 %v1202
        %1274 = vmatprep.subr.mxu0 %v1201
        %1275 = vmatpush2.msra.mxu0 %v1200
        %1276 = vmatprep.subr.mxu0 %v1199
        %1277 = vmatpush2.msra.mxu0 %v1198
        %1278 = vmatprep.subr.mxu0 %v1197
        %1279 = vmatpush2.msra.mxu0 %v1196
        %1280 = vmatprep.subr.mxu0 %v1195
        %1281 = vmatpush2.msra.mxu0 %v1194
        %1282 = vmatprep.subr.mxu0 %v1193
        %1283 = vmatpush2.msra.mxu0 %v1192
        %1284 = vmatprep.subr.mxu0 %v1191
        %1285 = vmatpush2.msra.mxu0 %v1190
        %1286 = vmatprep.subr.mxu0 %v1189
        %1287 = vmatpush2.msra.mxu0 %v1188
        %1288 = vmatprep.subr.mxu0 %v1187
        %1289 = vmatpush2.msra.mxu0 %v1186
        %1290 = vmatprep.subr.mxu0 %v1185
        %1291 = vmatpush2.msra.mxu0 %v1184
        %1292 = vmatprep.mubr.f32.mxu0 %v852
        %1293 = vmatmul.mubr.f32.gmra.mxu0 %v851
        %v1294 = vpop.f32.mrf.mxu0
        %v1295 = vadd.f32 %v1221, %v1294
        %v1296 = vpop.f32.mrf.mxu0
        %v1297 = vadd.f32 %v1225, %v1296
        %1298 = vmatprep.mubr.f32.mxu0 %v854
        %1299 = vmatmul.mubr.f32.gmra.mxu0 %v853
        %v1300 = vpop.f32.mrf.mxu0
        %v1301 = vadd.f32 %v1221, %v1300
        %v1302 = vpop.f32.mrf.mxu0
        %v1303 = vadd.f32 %v1225, %v1302
        %1304 = vmatprep.mubr.f32.mxu0 %v856
        %1305 = vmatmul.mubr.f32.gmra.mxu0 %v855
        %v1306 = vpop.f32.mrf.mxu0
        %v1307 = vadd.f32 %v1221, %v1306
        %v1308 = vpop.f32.mrf.mxu0
        %v1309 = vadd.f32 %v1225, %v1308
        %1310 = vmatprep.mubr.f32.mxu0 %v858
        %1311 = vmatmul.mubr.f32.gmra.mxu0 %v857
        %v1312 = vpop.f32.mrf.mxu0
        %v1313 = vadd.f32 %v1221, %v1312
        %v1314 = vpop.f32.mrf.mxu0
        %v1315 = vadd.f32 %v1225, %v1314
        %1316 = vmatprep.mubr.f32.mxu0 %v860
        %1317 = vmatmul.mubr.f32.gmra.mxu0 %v859
        %v1318 = vpop.f32.mrf.mxu0
        %v1319 = vadd.f32 %v1221, %v1318
        %v1320 = vpop.f32.mrf.mxu0
        %v1321 = vadd.f32 %v1225, %v1320
        %1322 = vmatprep.mubr.f32.mxu0 %v862
        %1323 = vmatmul.mubr.f32.gmra.mxu0 %v861
        %v1324 = vpop.f32.mrf.mxu0
        %v1325 = vadd.f32 %v1221, %v1324
        %v1326 = vpop.f32.mrf.mxu0
        %v1327 = vadd.f32 %v1225, %v1326
        %1328 = vmatprep.mubr.f32.mxu0 %v864
        %1329 = vmatmul.mubr.f32.gmra.mxu0 %v863
        %v1330 = vpop.f32.mrf.mxu0
        %v1331 = vadd.f32 %v1221, %v1330
        %v1332 = vpop.f32.mrf.mxu0
        %v1333 = vadd.f32 %v1225, %v1332
        %1334 = vmatprep.mubr.f32.mxu0 %v866
        %1335 = vmatmul.mubr.f32.gmra.mxu0 %v865
        %v1336 = vpop.f32.mrf.mxu0
        %v1337 = vadd.f32 %v1221, %v1336
        %v1338 = vpop.f32.mrf.mxu0
        %v1339 = vadd.f32 %v1225, %v1338
        %1340 = vmatprep.mubr.f32.mxu0 %v868
        %1341 = vmatmul.mubr.f32.gmra.mxu0 %v867
        %v1342 = vpop.f32.mrf.mxu0
        %v1343 = vadd.f32 %v1221, %v1342
        %v1344 = vpop.f32.mrf.mxu0
        %v1345 = vadd.f32 %v1225, %v1344
        %1346 = vmatprep.mubr.f32.mxu0 %v870
        %1347 = vmatmul.mubr.f32.gmra.mxu0 %v869
        %v1348 = vpop.f32.mrf.mxu0
        %v1349 = vadd.f32 %v1221, %v1348
        %v1350 = vpop.f32.mrf.mxu0
        %v1351 = vadd.f32 %v1225, %v1350
        %1352 = vmatprep.mubr.f32.mxu0 %v872
        %1353 = vmatmul.mubr.f32.gmra.mxu0 %v871
        %v1354 = vpop.f32.mrf.mxu0
        %v1355 = vadd.f32 %v1221, %v1354
        %v1356 = vpop.f32.mrf.mxu0
        %v1357 = vadd.f32 %v1225, %v1356
        %1358 = vmatprep.mubr.f32.mxu0 %v874
        %1359 = vmatmul.mubr.f32.gmra.mxu0 %v873
        %v1360 = vpop.f32.mrf.mxu0
        %v1361 = vadd.f32 %v1221, %v1360
        %v1362 = vpop.f32.mrf.mxu0
        %v1363 = vadd.f32 %v1225, %v1362
        %1364 = vmatprep.mubr.f32.mxu0 %v876
        %1365 = vmatmul.mubr.f32.gmra.mxu0 %v875
        %v1366 = vpop.f32.mrf.mxu0
        %v1367 = vadd.f32 %v1221, %v1366
        %v1368 = vpop.f32.mrf.mxu0
        %v1369 = vadd.f32 %v1225, %v1368
        %1370 = vmatprep.mubr.f32.mxu0 %v878
        %1371 = vmatmul.mubr.f32.gmra.mxu0 %v877
        %v1372 = vpop.f32.mrf.mxu0
        %v1373 = vadd.f32 %v1221, %v1372
        %v1374 = vpop.f32.mrf.mxu0
        %v1375 = vadd.f32 %v1225, %v1374
        %1376 = vmatprep.mubr.f32.mxu0 %v880
        %1377 = vmatmul.mubr.f32.gmra.mxu0 %v879
        %v1378 = vpop.f32.mrf.mxu0
        %v1379 = vadd.f32 %v1221, %v1378
        %v1380 = vpop.f32.mrf.mxu0
        %v1381 = vadd.f32 %v1225, %v1380
        %1382 = vmatprep.mubr.f32.mxu0 %v882
        %1383 = vmatmul.mubr.f32.gmra.mxu0 %v881
        %v1384 = vpop.f32.mrf.mxu0
        %v1385 = vadd.f32 %v1221, %v1384
        %v1386 = vpop.f32.mrf.mxu0
        %v1387 = vadd.f32 %v1225, %v1386
        %1388 = vdwg.mxu0
        %v1389 = vld [vmem:[#allocation10] sm:$0xff]
        %v1390 = vld [vmem:[#allocation10 + $0x8] sm:$0xff]
        %v1391 = vld [vmem:[#allocation10 + $0x10] sm:$0xff]
        %v1392 = vld [vmem:[#allocation10 + $0x18] sm:$0xff]
        %v1393 = vld [vmem:[#allocation10 + $0x20] sm:$0xff]
        %v1394 = vld [vmem:[#allocation10 + $0x28] sm:$0xff]
        %v1395 = vld [vmem:[#allocation10 + $0x30] sm:$0xff]
        %v1396 = vld [vmem:[#allocation10 + $0x38] sm:$0xff]
        %v1397 = vld [vmem:[#allocation10 + $0x40] sm:$0xff]
        %v1398 = vld [vmem:[#allocation10 + $0x48] sm:$0xff]
        %v1399 = vld [vmem:[#allocation10 + $0x50] sm:$0xff]
        %v1400 = vld [vmem:[#allocation10 + $0x58] sm:$0xff]
        %v1401 = vld [vmem:[#allocation10 + $0x60] sm:$0xff]
        %v1402 = vld [vmem:[#allocation10 + $0x68] sm:$0xff]
        %v1403 = vld [vmem:[#allocation10 + $0x70] sm:$0xff]
        %v1404 = vld [vmem:[#allocation10 + $0x78] sm:$0xff]
        %v1405 = vld [vmem:[#allocation10 + $0x80] sm:$0xff]
        %v1406 = vld [vmem:[#allocation10 + $0x88] sm:$0xff]
        %v1407 = vld [vmem:[#allocation10 + $0x90] sm:$0xff]
        %v1408 = vld [vmem:[#allocation10 + $0x98] sm:$0xff]
        %v1409 = vld [vmem:[#allocation10 + $0xa0] sm:$0xff]
        %v1410 = vld [vmem:[#allocation10 + $0xa8] sm:$0xff]
        %v1411 = vld [vmem:[#allocation10 + $0xb0] sm:$0xff]
        %v1412 = vld [vmem:[#allocation10 + $0xb8] sm:$0xff]
        %v1413 = vld [vmem:[#allocation10 + $0xc0] sm:$0xff]
        %v1414 = vld [vmem:[#allocation10 + $0xc8] sm:$0xff]
        %v1415 = vld [vmem:[#allocation10 + $0xd0] sm:$0xff]
        %v1416 = vld [vmem:[#allocation10 + $0xd8] sm:$0xff]
        %v1417 = vld [vmem:[#allocation10 + $0xe0] sm:$0xff]
        %v1418 = vld [vmem:[#allocation10 + $0xe8] sm:$0xff]
        %v1419 = vld [vmem:[#allocation10 + $0xf0] sm:$0xff]
        %v1420 = vld [vmem:[#allocation10 + $0xf8] sm:$0xff]
        %v1421 = vld [vmem:[#allocation10 + $0x100] sm:$0xff]
        %v1422 = vld [vmem:[#allocation10 + $0x108] sm:$0xff]
        %v1423 = vld [vmem:[#allocation10 + $0x110] sm:$0xff]
        %v1424 = vld [vmem:[#allocation10 + $0x118] sm:$0xff]
        %v1425 = vld [vmem:[#allocation10 + $0x120] sm:$0xff]
        %v1426 = vld [vmem:[#allocation10 + $0x128] sm:$0xff]
        %v1427 = vld [vmem:[#allocation10 + $0x130] sm:$0xff]
        %v1428 = vld [vmem:[#allocation10 + $0x138] sm:$0xff]
        %v1429 = vld [vmem:[#allocation10 + $0x140] sm:$0xff]
        %v1430 = vld [vmem:[#allocation10 + $0x148] sm:$0xff]
        %v1431 = vld [vmem:[#allocation10 + $0x150] sm:$0xff]
        %v1432 = vld [vmem:[#allocation10 + $0x158] sm:$0xff]
        %v1433 = vld [vmem:[#allocation10 + $0x160] sm:$0xff]
        %v1434 = vld [vmem:[#allocation10 + $0x168] sm:$0xff]
        %v1435 = vld [vmem:[#allocation10 + $0x170] sm:$0xff]
        %v1436 = vld [vmem:[#allocation10 + $0x178] sm:$0xff]
        %v1437 = vld [vmem:[#allocation10 + $0x180] sm:$0xff]
        %v1438 = vld [vmem:[#allocation10 + $0x188] sm:$0xff]
        %v1439 = vld [vmem:[#allocation10 + $0x190] sm:$0xff]
        %v1440 = vld [vmem:[#allocation10 + $0x198] sm:$0xff]
        %v1441 = vld [vmem:[#allocation10 + $0x1a0] sm:$0xff]
        %v1442 = vld [vmem:[#allocation10 + $0x1a8] sm:$0xff]
        %v1443 = vld [vmem:[#allocation10 + $0x1b0] sm:$0xff]
        %v1444 = vld [vmem:[#allocation10 + $0x1b8] sm:$0xff]
        %v1445 = vld [vmem:[#allocation10 + $0x1c0] sm:$0xff]
        %v1446 = vld [vmem:[#allocation10 + $0x1c8] sm:$0xff]
        %v1447 = vld [vmem:[#allocation10 + $0x1d0] sm:$0xff]
        %v1448 = vld [vmem:[#allocation10 + $0x1d8] sm:$0xff]
        %v1449 = vld [vmem:[#allocation10 + $0x1e0] sm:$0xff]
        %v1450 = vld [vmem:[#allocation10 + $0x1e8] sm:$0xff]
        %v1451 = vld [vmem:[#allocation10 + $0x1f0] sm:$0xff]
        %v1452 = vld [vmem:[#allocation10 + $0x1f8] sm:$0xff]
        %v1453 = vld [vmem:[%s8] sm:$0x3]
        %v1455 = vlaneseq
        %v1456 = vshrl.u32 %v1455, 7
        %v1457 = vsub.s32 0, %v1456
        %v1458 = vrot.slane %v1453, %v1457
        %v1459 = vlaneseq
        %v1460 = vshrl.u32 %v1459, 7
        %v1461 = vsub.s32 1, %v1460
        %v1462 = vrot.slane %v1453, %v1461
        %1465 = vmatprep.subr.mxu0 %v1420
        %1466 = vmatpush1.msra.mxu0 %v1419
        %1467 = vmatprep.subr.mxu0 %v1418
        %1468 = vmatpush1.msra.mxu0 %v1417
        %1469 = vmatprep.subr.mxu0 %v1416
        %1470 = vmatpush1.msra.mxu0 %v1415
        %1471 = vmatprep.subr.mxu0 %v1414
        %1472 = vmatpush1.msra.mxu0 %v1413
        %1473 = vmatprep.subr.mxu0 %v1412
        %1474 = vmatpush1.msra.mxu0 %v1411
        %1475 = vmatprep.subr.mxu0 %v1410
        %1476 = vmatpush1.msra.mxu0 %v1409
        %1477 = vmatprep.subr.mxu0 %v1408
        %1478 = vmatpush1.msra.mxu0 %v1407
        %1479 = vmatprep.subr.mxu0 %v1406
        %1480 = vmatpush1.msra.mxu0 %v1405
        %1481 = vmatprep.subr.mxu0 %v1404
        %1482 = vmatpush1.msra.mxu0 %v1403
        %1483 = vmatprep.subr.mxu0 %v1402
        %1484 = vmatpush1.msra.mxu0 %v1401
        %1485 = vmatprep.subr.mxu0 %v1400
        %1486 = vmatpush1.msra.mxu0 %v1399
        %1487 = vmatprep.subr.mxu0 %v1398
        %1488 = vmatpush1.msra.mxu0 %v1397
        %1489 = vmatprep.subr.mxu0 %v1396
        %1490 = vmatpush1.msra.mxu0 %v1395
        %1491 = vmatprep.subr.mxu0 %v1394
        %1492 = vmatpush1.msra.mxu0 %v1393
        %1493 = vmatprep.subr.mxu0 %v1392
        %1494 = vmatpush1.msra.mxu0 %v1391
        %1495 = vmatprep.subr.mxu0 %v1390
        %1496 = vmatpush1.msra.mxu0 %v1389
        %1497 = vmatprep.subr.mxu0 %v1452
        %1498 = vmatpush2.msra.mxu0 %v1451
        %1499 = vmatprep.subr.mxu0 %v1450
        %1500 = vmatpush2.msra.mxu0 %v1449
        %1501 = vmatprep.subr.mxu0 %v1448
        %1502 = vmatpush2.msra.mxu0 %v1447
        %1503 = vmatprep.subr.mxu0 %v1446
        %1504 = vmatpush2.msra.mxu0 %v1445
        %1505 = vmatprep.subr.mxu0 %v1444
        %1506 = vmatpush2.msra.mxu0 %v1443
        %1507 = vmatprep.subr.mxu0 %v1442
        %1508 = vmatpush2.msra.mxu0 %v1441
        %1509 = vmatprep.subr.mxu0 %v1440
        %1510 = vmatpush2.msra.mxu0 %v1439
        %1511 = vmatprep.subr.mxu0 %v1438
        %1512 = vmatpush2.msra.mxu0 %v1437
        %1513 = vmatprep.subr.mxu0 %v1436
        %1514 = vmatpush2.msra.mxu0 %v1435
        %1515 = vmatprep.subr.mxu0 %v1434
        %1516 = vmatpush2.msra.mxu0 %v1433
        %1517 = vmatprep.subr.mxu0 %v1432
        %1518 = vmatpush2.msra.mxu0 %v1431
        %1519 = vmatprep.subr.mxu0 %v1430
        %1520 = vmatpush2.msra.mxu0 %v1429
        %1521 = vmatprep.subr.mxu0 %v1428
        %1522 = vmatpush2.msra.mxu0 %v1427
        %1523 = vmatprep.subr.mxu0 %v1426
        %1524 = vmatpush2.msra.mxu0 %v1425
        %1525 = vmatprep.subr.mxu0 %v1424
        %1526 = vmatpush2.msra.mxu0 %v1423
        %1527 = vmatprep.subr.mxu0 %v1422
        %1528 = vmatpush2.msra.mxu0 %v1421
        %1529 = vmatprep.mubr.f32.mxu0 %v852
        %1530 = vmatmul.mubr.f32.gmra.mxu0 %v851
        %v1531 = vpop.f32.mrf.mxu0
        %v1532 = vadd.f32 %v1458, %v1531
        %v1533 = vpop.f32.mrf.mxu0
        %v1534 = vadd.f32 %v1462, %v1533
        %1535 = vmatprep.mubr.f32.mxu0 %v854
        %1536 = vmatmul.mubr.f32.gmra.mxu0 %v853
        %v1537 = vpop.f32.mrf.mxu0
        %v1538 = vadd.f32 %v1458, %v1537
        %v1539 = vpop.f32.mrf.mxu0
        %v1540 = vadd.f32 %v1462, %v1539
        %1541 = vmatprep.mubr.f32.mxu0 %v856
        %1542 = vmatmul.mubr.f32.gmra.mxu0 %v855
        %v1543 = vpop.f32.mrf.mxu0
        %v1544 = vadd.f32 %v1458, %v1543
        %v1545 = vpop.f32.mrf.mxu0
        %v1546 = vadd.f32 %v1462, %v1545
        %1547 = vmatprep.mubr.f32.mxu0 %v858
        %1548 = vmatmul.mubr.f32.gmra.mxu0 %v857
        %v1549 = vpop.f32.mrf.mxu0
        %v1550 = vadd.f32 %v1458, %v1549
        %v1551 = vpop.f32.mrf.mxu0
        %v1552 = vadd.f32 %v1462, %v1551
        %1553 = vmatprep.mubr.f32.mxu0 %v860
        %1554 = vmatmul.mubr.f32.gmra.mxu0 %v859
        %v1555 = vpop.f32.mrf.mxu0
        %v1556 = vadd.f32 %v1458, %v1555
        %v1557 = vpop.f32.mrf.mxu0
        %v1558 = vadd.f32 %v1462, %v1557
        %1559 = vmatprep.mubr.f32.mxu0 %v862
        %1560 = vmatmul.mubr.f32.gmra.mxu0 %v861
        %v1561 = vpop.f32.mrf.mxu0
        %v1562 = vadd.f32 %v1458, %v1561
        %v1563 = vpop.f32.mrf.mxu0
        %v1564 = vadd.f32 %v1462, %v1563
        %1565 = vmatprep.mubr.f32.mxu0 %v864
        %1566 = vmatmul.mubr.f32.gmra.mxu0 %v863
        %v1567 = vpop.f32.mrf.mxu0
        %v1568 = vadd.f32 %v1458, %v1567
        %v1569 = vpop.f32.mrf.mxu0
        %v1570 = vadd.f32 %v1462, %v1569
        %1571 = vmatprep.mubr.f32.mxu0 %v866
        %1572 = vmatmul.mubr.f32.gmra.mxu0 %v865
        %v1573 = vpop.f32.mrf.mxu0
        %v1574 = vadd.f32 %v1458, %v1573
        %v1575 = vpop.f32.mrf.mxu0
        %v1576 = vadd.f32 %v1462, %v1575
        %1577 = vmatprep.mubr.f32.mxu0 %v868
        %1578 = vmatmul.mubr.f32.gmra.mxu0 %v867
        %v1579 = vpop.f32.mrf.mxu0
        %v1580 = vadd.f32 %v1458, %v1579
        %v1581 = vpop.f32.mrf.mxu0
        %v1582 = vadd.f32 %v1462, %v1581
        %1583 = vmatprep.mubr.f32.mxu0 %v870
        %1584 = vmatmul.mubr.f32.gmra.mxu0 %v869
        %v1585 = vpop.f32.mrf.mxu0
        %v1586 = vadd.f32 %v1458, %v1585
        %v1587 = vpop.f32.mrf.mxu0
        %v1588 = vadd.f32 %v1462, %v1587
        %1589 = vmatprep.mubr.f32.mxu0 %v872
        %1590 = vmatmul.mubr.f32.gmra.mxu0 %v871
        %v1591 = vpop.f32.mrf.mxu0
        %v1592 = vadd.f32 %v1458, %v1591
        %v1593 = vpop.f32.mrf.mxu0
        %v1594 = vadd.f32 %v1462, %v1593
        %1595 = vmatprep.mubr.f32.mxu0 %v874
        %1596 = vmatmul.mubr.f32.gmra.mxu0 %v873
        %v1597 = vpop.f32.mrf.mxu0
        %v1598 = vadd.f32 %v1458, %v1597
        %v1599 = vpop.f32.mrf.mxu0
        %v1600 = vadd.f32 %v1462, %v1599
        %1601 = vmatprep.mubr.f32.mxu0 %v876
        %1602 = vmatmul.mubr.f32.gmra.mxu0 %v875
        %v1603 = vpop.f32.mrf.mxu0
        %v1604 = vadd.f32 %v1458, %v1603
        %v1605 = vpop.f32.mrf.mxu0
        %v1606 = vadd.f32 %v1462, %v1605
        %1607 = vmatprep.mubr.f32.mxu0 %v878
        %1608 = vmatmul.mubr.f32.gmra.mxu0 %v877
        %v1609 = vpop.f32.mrf.mxu0
        %v1610 = vadd.f32 %v1458, %v1609
        %v1611 = vpop.f32.mrf.mxu0
        %v1612 = vadd.f32 %v1462, %v1611
        %1613 = vmatprep.mubr.f32.mxu0 %v880
        %1614 = vmatmul.mubr.f32.gmra.mxu0 %v879
        %v1615 = vpop.f32.mrf.mxu0
        %v1616 = vadd.f32 %v1458, %v1615
        %v1617 = vpop.f32.mrf.mxu0
        %v1618 = vadd.f32 %v1462, %v1617
        %1619 = vmatprep.mubr.f32.mxu0 %v882
        %1620 = vmatmul.mubr.f32.gmra.mxu0 %v881
        %v1621 = vpop.f32.mrf.mxu0
        %v1622 = vadd.f32 %v1458, %v1621
        %v1623 = vpop.f32.mrf.mxu0
        %v1624 = vadd.f32 %v1462, %v1623
        %1625 = vdwg.mxu0
        %1626 = vst [vmem:[%s487] sm:$0xff] %v1120
        %1627 = vst [vmem:[%s487 + $0x8] sm:$0xff] %v1122
        %1628 = vst [vmem:[%s487 + $0x10] sm:$0xff] %v1124
        %1629 = vst [vmem:[%s487 + $0x18] sm:$0xff] %v1126
        %1630 = vst [vmem:[%s487 + $0x20] sm:$0xff] %v1128
        %1631 = vst [vmem:[%s487 + $0x28] sm:$0xff] %v1130
        %1632 = vst [vmem:[%s487 + $0x30] sm:$0xff] %v1132
        %1633 = vst [vmem:[%s487 + $0x38] sm:$0xff] %v1134
        %1634 = vst [vmem:[%s487 + $0x40] sm:$0xff] %v1136
        %1635 = vst [vmem:[%s487 + $0x48] sm:$0xff] %v1138
        %1636 = vst [vmem:[%s487 + $0x50] sm:$0xff] %v1140
        %1637 = vst [vmem:[%s487 + $0x58] sm:$0xff] %v1142
        %1638 = vst [vmem:[%s487 + $0x60] sm:$0xff] %v1144
        %1639 = vst [vmem:[%s487 + $0x68] sm:$0xff] %v1146
        %1640 = vst [vmem:[%s487 + $0x70] sm:$0xff] %v1148
        %1641 = vst [vmem:[%s487 + $0x78] sm:$0xff] %v1150
        %1642 = vst [vmem:[%s494] sm:$0xff] %v1295
        %1643 = vst [vmem:[%s494 + $0x8] sm:$0xff] %v1301
        %1644 = vst [vmem:[%s494 + $0x10] sm:$0xff] %v1307
        %1645 = vst [vmem:[%s494 + $0x18] sm:$0xff] %v1313
        %1646 = vst [vmem:[%s494 + $0x20] sm:$0xff] %v1319
        %1647 = vst [vmem:[%s494 + $0x28] sm:$0xff] %v1325
        %1648 = vst [vmem:[%s494 + $0x30] sm:$0xff] %v1331
        %1649 = vst [vmem:[%s494 + $0x38] sm:$0xff] %v1337
        %1650 = vst [vmem:[%s494 + $0x40] sm:$0xff] %v1343
        %1651 = vst [vmem:[%s494 + $0x48] sm:$0xff] %v1349
        %1652 = vst [vmem:[%s494 + $0x50] sm:$0xff] %v1355
        %1653 = vst [vmem:[%s494 + $0x58] sm:$0xff] %v1361
        %1654 = vst [vmem:[%s494 + $0x60] sm:$0xff] %v1367
        %1655 = vst [vmem:[%s494 + $0x68] sm:$0xff] %v1373
        %1656 = vst [vmem:[%s494 + $0x70] sm:$0xff] %v1379
        %1657 = vst [vmem:[%s494 + $0x78] sm:$0xff] %v1385
        %1658 = vst [vmem:[%s501] sm:$0xff] %v1532
        %1659 = vst [vmem:[%s501 + $0x8] sm:$0xff] %v1538
        %1660 = vst [vmem:[%s501 + $0x10] sm:$0xff] %v1544
        %1661 = vst [vmem:[%s501 + $0x18] sm:$0xff] %v1550
        %1662 = vst [vmem:[%s501 + $0x20] sm:$0xff] %v1556
        %1663 = vst [vmem:[%s501 + $0x28] sm:$0xff] %v1562
        %1664 = vst [vmem:[%s501 + $0x30] sm:$0xff] %v1568
        %1665 = vst [vmem:[%s501 + $0x38] sm:$0xff] %v1574
        %1666 = vst [vmem:[%s501 + $0x40] sm:$0xff] %v1580
        %1667 = vst [vmem:[%s501 + $0x48] sm:$0xff] %v1586
        %1668 = vst [vmem:[%s501 + $0x50] sm:$0xff] %v1592
        %1669 = vst [vmem:[%s501 + $0x58] sm:$0xff] %v1598
        %1670 = vst [vmem:[%s501 + $0x60] sm:$0xff] %v1604
        %1671 = vst [vmem:[%s501 + $0x68] sm:$0xff] %v1610
        %1672 = vst [vmem:[%s501 + $0x70] sm:$0xff] %v1616
        %1673 = vst [vmem:[%s501 + $0x78] sm:$0xff] %v1622
        %s1674 = scalar_lea.vmem %s487, 128 [#allocation11]
        %1675 = vst [vmem:[%s1674] sm:$0xff] %v1121
        %1676 = vst [vmem:[%s1674 + $0x8] sm:$0xff] %v1123
        %1677 = vst [vmem:[%s1674 + $0x10] sm:$0xff] %v1125
        %1678 = vst [vmem:[%s1674 + $0x18] sm:$0xff] %v1127
        %1679 = vst [vmem:[%s1674 + $0x20] sm:$0xff] %v1129
        %1680 = vst [vmem:[%s1674 + $0x28] sm:$0xff] %v1131
        %1681 = vst [vmem:[%s1674 + $0x30] sm:$0xff] %v1133
        %1682 = vst [vmem:[%s1674 + $0x38] sm:$0xff] %v1135
        %1683 = vst [vmem:[%s1674 + $0x40] sm:$0xff] %v1137
        %1684 = vst [vmem:[%s1674 + $0x48] sm:$0xff] %v1139
        %1685 = vst [vmem:[%s1674 + $0x50] sm:$0xff] %v1141
        %1686 = vst [vmem:[%s1674 + $0x58] sm:$0xff] %v1143
        %1687 = vst [vmem:[%s1674 + $0x60] sm:$0xff] %v1145
        %1688 = vst [vmem:[%s1674 + $0x68] sm:$0xff] %v1147
        %1689 = vst [vmem:[%s1674 + $0x70] sm:$0xff] %v1149
        %1690 = vst [vmem:[%s1674 + $0x78] sm:$0xff] %v1151
        %s1691 = scalar_lea.vmem %s494, 128 [#allocation12]
        %1692 = vst [vmem:[%s1691] sm:$0xff] %v1297
        %1693 = vst [vmem:[%s1691 + $0x8] sm:$0xff] %v1303
        %1694 = vst [vmem:[%s1691 + $0x10] sm:$0xff] %v1309
        %1695 = vst [vmem:[%s1691 + $0x18] sm:$0xff] %v1315
        %1696 = vst [vmem:[%s1691 + $0x20] sm:$0xff] %v1321
        %1697 = vst [vmem:[%s1691 + $0x28] sm:$0xff] %v1327
        %1698 = vst [vmem:[%s1691 + $0x30] sm:$0xff] %v1333
        %1699 = vst [vmem:[%s1691 + $0x38] sm:$0xff] %v1339
        %1700 = vst [vmem:[%s1691 + $0x40] sm:$0xff] %v1345
        %1701 = vst [vmem:[%s1691 + $0x48] sm:$0xff] %v1351
        %1702 = vst [vmem:[%s1691 + $0x50] sm:$0xff] %v1357
        %1703 = vst [vmem:[%s1691 + $0x58] sm:$0xff] %v1363
        %1704 = vst [vmem:[%s1691 + $0x60] sm:$0xff] %v1369
        %1705 = vst [vmem:[%s1691 + $0x68] sm:$0xff] %v1375
        %1706 = vst [vmem:[%s1691 + $0x70] sm:$0xff] %v1381
        %1707 = vst [vmem:[%s1691 + $0x78] sm:$0xff] %v1387
        %s1708 = scalar_lea.vmem %s501, 128 [#allocation14]
        %1709 = vst [vmem:[%s1708] sm:$0xff] %v1534
        %1710 = vst [vmem:[%s1708 + $0x8] sm:$0xff] %v1540
        %1711 = vst [vmem:[%s1708 + $0x10] sm:$0xff] %v1546
        %1712 = vst [vmem:[%s1708 + $0x18] sm:$0xff] %v1552
        %1713 = vst [vmem:[%s1708 + $0x20] sm:$0xff] %v1558
        %1714 = vst [vmem:[%s1708 + $0x28] sm:$0xff] %v1564
        %1715 = vst [vmem:[%s1708 + $0x30] sm:$0xff] %v1570
        %1716 = vst [vmem:[%s1708 + $0x38] sm:$0xff] %v1576
        %1717 = vst [vmem:[%s1708 + $0x40] sm:$0xff] %v1582
        %1718 = vst [vmem:[%s1708 + $0x48] sm:$0xff] %v1588
        %1719 = vst [vmem:[%s1708 + $0x50] sm:$0xff] %v1594
        %1720 = vst [vmem:[%s1708 + $0x58] sm:$0xff] %v1600
        %1721 = vst [vmem:[%s1708 + $0x60] sm:$0xff] %v1606
        %1722 = vst [vmem:[%s1708 + $0x68] sm:$0xff] %v1612
        %1723 = vst [vmem:[%s1708 + $0x70] sm:$0xff] %v1618
        %1724 = vst [vmem:[%s1708 + $0x78] sm:$0xff] %v1624
        %s1725 = sand.u32 %s252, 1
        %s1726 = scalar_lea.sflag [#allocation4], %s1725
        %s1727 = sand.u32 %s252, 1
        %s1728 = smul.addr %s1727, 256
        %s1729 = scalar_lea.vmem [#allocation11], %s1728
        %s1730 = sand.u32 %s34, 1
        %s1731 = scalar_lea.sflag [#allocation13], %s1730
        %s1732 = sand.u32 %s280, 1
        %s1733 = smul.addr %s1732, 256
        %s1734 = scalar_lea.vmem [#allocation12], %s1733
        %s1735 = sand.u32 %s34, 1
        %s1736 = scalar_lea.sflag [#allocation13], %s1735
        %s1737 = sand.u32 %s308, 1
        %s1738 = smul.addr %s1737, 256
        %s1739 = scalar_lea.vmem [#allocation14], %s1738
        // Predicated region
        $region77: #{tpu_custom_call.1} parent=55 // pred_check
          %p1740 = pneg %p262
        $region78: #{tpu_custom_call.1} parent=55 // pred_check_branch
          %1742 = sbr.rel (%p1740) target = $region80
        $region79: #{tpu_custom_call.1} parent=55 // pred_region
          #allocation16 [shape = 'u32[6]{0}', space=smem, size = 0x18, scoped, tag = 'DMA stride descriptor']
          %s1743 = smul.u32 16, %s39
          %s1745 = ssub.s32 4096, 4096
          %1746 = vsyncadd %s1726, %s1745
          %s1747 = smul.addr %s38, 64
          %s1748 = sadd.s32 %s1743, %s1747
          %s1749 = smul.addr %s1748, 128
          %s1750 = scalar_lea.hbm %s9, %s1749
          %s1752 = sshll.u32 1, 14
          %s1753 = sxor.u32 4294967295, %s1752
          %s1756 = sshll.u32 7, 18
          %s1757 = sxor.u32 4294967295, %s1756
          %s1758 = sand.u32 0, %s1757
          %s1760 = sor.u32 %s1758, 0
          %s1761 = sshll.u32 %s1729, 4
          %s1762 = int_to_ptr.vmem [resolvable:$true] %s1761
          %1768 = sst [smem:[#allocation16]] 2048
          %s1769 = scalar_lea.smem [#allocation16], 1
          %1770 = sst [smem:[%s1769]] 4096
          %s1771 = scalar_lea.smem [#allocation16], 2
          %1772 = sst [smem:[%s1771]] 16
          %s1773 = scalar_lea.smem [#allocation16], 3
          %1774 = sst [smem:[%s1773]] 128
          %s1775 = scalar_lea.smem [#allocation16], 4
          %1776 = sst [smem:[%s1775]] 128
          %s1777 = scalar_lea.smem [#allocation16], 5
          %1778 = sst [smem:[%s1777]] 8
          %1780 = dma.general %s1762, 4096, %s1750, %s1726, 131072, [#allocation16], %s1760, 0
        $region80: #{tpu_custom_call.1} parent=55 // pred_fallthru
          _
        // Predicated region
        $region81: #{tpu_custom_call.1} parent=55 // pred_check
          %p1781 = pneg %p290
        $region82: #{tpu_custom_call.1} parent=55 // pred_check_branch
          %1783 = sbr.rel (%p1781) target = $region84
        $region83: #{tpu_custom_call.1} parent=55 // pred_region
          #allocation18 [shape = 'u32[6]{0}', space=smem, size = 0x18, scoped, tag = 'DMA stride descriptor']
          %s1784 = smul.u32 16, %s39
          %s1786 = ssub.s32 4096, 4096
          %1787 = vsyncadd %s1731, %s1786
          %s1788 = smul.addr %s38, 64
          %s1789 = sadd.s32 %s1784, %s1788
          %s1790 = smul.addr %s1789, 128
          %s1791 = scalar_lea.hbm %s10, %s1790
          %s1793 = sshll.u32 1, 14
          %s1794 = sxor.u32 4294967295, %s1793
          %s1797 = sshll.u32 7, 18
          %s1798 = sxor.u32 4294967295, %s1797
          %s1799 = sand.u32 0, %s1798
          %s1801 = sor.u32 %s1799, 0
          %s1802 = sshll.u32 %s1734, 4
          %s1803 = int_to_ptr.vmem [resolvable:$true] %s1802
          %1809 = sst [smem:[#allocation18]] 2048
          %s1810 = scalar_lea.smem [#allocation18], 1
          %1811 = sst [smem:[%s1810]] 4096
          %s1812 = scalar_lea.smem [#allocation18], 2
          %1813 = sst [smem:[%s1812]] 16
          %s1814 = scalar_lea.smem [#allocation18], 3
          %1815 = sst [smem:[%s1814]] 128
          %s1816 = scalar_lea.smem [#allocation18], 4
          %1817 = sst [smem:[%s1816]] 128
          %s1818 = scalar_lea.smem [#allocation18], 5
          %1819 = sst [smem:[%s1818]] 8
          %1821 = dma.general %s1803, 4096, %s1791, %s1731, 131072, [#allocation18], %s1801, 0
        $region84: #{tpu_custom_call.1} parent=55 // pred_fallthru
          _
        // Predicated region
        $region85: #{tpu_custom_call.1} parent=55 // pred_check
          %p1822 = pneg %p318
        $region86: #{tpu_custom_call.1} parent=55 // pred_check_branch
          %1824 = sbr.rel (%p1822) target = $region88
        $region87: #{tpu_custom_call.1} parent=55 // pred_region
          #allocation20 [shape = 'u32[6]{0}', space=smem, size = 0x18, scoped, tag = 'DMA stride descriptor']
          %s1825 = smul.u32 16, %s39
          %s1827 = ssub.s32 4096, 4096
          %1828 = vsyncadd %s1736, %s1827
          %s1829 = smul.addr %s38, 64
          %s1830 = sadd.s32 %s1825, %s1829
          %s1831 = smul.addr %s1830, 128
          %s1832 = scalar_lea.hbm %s11, %s1831
          %s1834 = sshll.u32 1, 14
          %s1835 = sxor.u32 4294967295, %s1834
          %s1838 = sshll.u32 7, 18
          %s1839 = sxor.u32 4294967295, %s1838
          %s1840 = sand.u32 0, %s1839
          %s1842 = sor.u32 %s1840, 0
          %s1843 = sshll.u32 %s1739, 4
          %s1844 = int_to_ptr.vmem [resolvable:$true] %s1843
          %1850 = sst [smem:[#allocation20]] 2048
          %s1851 = scalar_lea.smem [#allocation20], 1
          %1852 = sst [smem:[%s1851]] 4096
          %s1853 = scalar_lea.smem [#allocation20], 2
          %1854 = sst [smem:[%s1853]] 16
          %s1855 = scalar_lea.smem [#allocation20], 3
          %1856 = sst [smem:[%s1855]] 128
          %s1857 = scalar_lea.smem [#allocation20], 4
          %1858 = sst [smem:[%s1857]] 128
          %s1859 = scalar_lea.smem [#allocation20], 5
          %1860 = sst [smem:[%s1859]] 8
          %1862 = dma.general %s1844, 4096, %s1832, %s1736, 131072, [#allocation20], %s1842, 0
        $region88: #{tpu_custom_call.1} parent=55 // pred_fallthru
          _
      $region56: #{tpu_custom_call.1} parent=5 // pred_fallthru
        _
      %p1863 = scmp.le.s32.totalorder 2, %s29
      // Predicated region
      $region89: #{tpu_custom_call.1} parent=5 // pred_check
        %p1864 = pneg %p1863
      $region90: #{tpu_custom_call.1} parent=5 // pred_check_branch
        %1866 = sbr.rel (%p1864) target = $region92
      $region91: #{tpu_custom_call.1} parent=5 // pred_region
        %s1867 = ssub.s32 %s29, 2
        // Predicated region
        $region93: #{tpu_custom_call.1} parent=91 // pred_check
          %p1868 = pneg %p268
        $region94: #{tpu_custom_call.1} parent=91 // pred_check_branch
          %1870 = sbr.rel (%p1868) target = $region96
        $region95: #{tpu_custom_call.1} parent=91 // pred_region
          %s1871 = sand.u32 %s253, 1
          %s1872 = scalar_lea.sflag [#allocation4], %s1871
          %s1873 = sand.u32 %s253, 1
          %s1874 = smul.addr %s1873, 256
          %s1875 = scalar_lea.vmem [#allocation11], %s1874
          %1876 = dma.done %s1872, 4096
        $region96: #{tpu_custom_call.1} parent=91 // pred_fallthru
          _
        // Predicated region
        $region97: #{tpu_custom_call.1} parent=91 // pred_check
          %p1877 = pneg %p296
        $region98: #{tpu_custom_call.1} parent=91 // pred_check_branch
          %1879 = sbr.rel (%p1877) target = $region100
        $region99: #{tpu_custom_call.1} parent=91 // pred_region
          %s1880 = sand.u32 %s35, 1
          %s1881 = scalar_lea.sflag [#allocation13], %s1880
          %s1882 = sand.u32 %s281, 1
          %s1883 = smul.addr %s1882, 256
          %s1884 = scalar_lea.vmem [#allocation12], %s1883
          %1885 = dma.done %s1881, 4096
        $region100: #{tpu_custom_call.1} parent=91 // pred_fallthru
          _
        // Predicated region
        $region101: #{tpu_custom_call.1} parent=91 // pred_check
          %p1886 = pneg %p324
        $region102: #{tpu_custom_call.1} parent=91 // pred_check_branch
          %1888 = sbr.rel (%p1886) target = $region104
        $region103: #{tpu_custom_call.1} parent=91 // pred_region
          %s1889 = sand.u32 %s35, 1
          %s1890 = scalar_lea.sflag [#allocation13], %s1889
          %s1891 = sand.u32 %s309, 1
          %s1892 = smul.addr %s1891, 256
          %s1893 = scalar_lea.vmem [#allocation14], %s1892
          %1894 = dma.done %s1890, 4096
        $region104: #{tpu_custom_call.1} parent=91 // pred_fallthru
          _
      $region92: #{tpu_custom_call.1} parent=5 // pred_fallthru
        _
    $region6: #{tpu_custom_call.1} parent=1 // loop_footer
      %s33 = sadd.s32 1, %s29
    $region7: #{tpu_custom_call.1} parent=1 // loop_footer_branch
      %28 = sbr.rel target = $region3
    $region8: #{tpu_custom_call.1} parent=1 // loop_exit
      _
    %1895 = vsyncpa [#allocation3], 1
    %s1896 = scalar_lea.sflag [#allocation3], 1
    %1897 = vsyncpa %s1896, 1
    %1898 = vsyncpa [#allocation6], 1
    %1899 = vsyncpa [#allocation9], 1
    %1900 = vsyncpa [#allocation4], 1
    %s1901 = scalar_lea.sflag [#allocation4], 1
    %1902 = vsyncpa %s1901, 1
    %1903 = vsyncpa [#allocation13], 1
    %s1904 = scalar_lea.sflag [#allocation13], 1
    %1905 = vsyncpa %s1904, 1

</llo_original>
